<compile_context>
chip_gen: v7x
topology: tpu7x:2x2x1
jax: 0.10.0
libtpu: 0.0.40
codegen_flags: <defaults>
</compile_context>

<pallas_src>
import functools

import numpy as np
import jax
import jax.numpy as jnp
from jax.experimental import pallas as pl
from jax.experimental.pallas import tpu as pltpu


def _round_up(x, m):
    return ((x + m - 1) // m) * m


# ----------------------------------------------------------------------------
# Trace-time constant / weight folding (tiny; runs in the XLA wrapper).
# ----------------------------------------------------------------------------
@functools.lru_cache(maxsize=None)
def _shift_taps(h_in, w_in, h_out, w_out, stride):
    """Per-tap 0/1 shift/select matrices (9, Pin, Pout).

    S[t, p_in, p_out] = 1 iff input position p_in feeds tap t of output p_out
    (missing rows implement the conv's zero padding)."""
    p_in, p_out = h_in * w_in, h_out * w_out
    s = np.zeros((9, p_in, p_out), np.float32)
    for ki in range(3):
        for kj in range(3):
            t = ki * 3 + kj
            for oh in range(h_out):
                ih = oh * stride + ki - 1
                if not 0 <= ih < h_in:
                    continue
                for ow in range(w_out):
                    iw = ow * stride + kj - 1
                    if 0 <= iw < w_in:
                        s[t, ih * w_in + iw, oh * w_out + ow] = 1.0
    return s


def _fold_conv(w_oihw, h_in, w_in, h_out, w_out, stride):
    """Fold a 3x3 conv (pad=1) into a dense (Cin*Pin, Cout*Pout) operator.

    Row index = c_in*Pin + (h*w_in + w); col index = c_out*Pout + (oh*w_out + ow)
    -> exactly the NCHW flatten ordering on both sides."""
    c_out, c_in = w_oihw.shape[0], w_oihw.shape[1]
    p_in, p_out = h_in * w_in, h_out * w_out
    s = jnp.asarray(_shift_taps(h_in, w_in, h_out, w_out, stride))     # (9,Pin,Pout)
    w_t = jnp.transpose(w_oihw, (2, 3, 0, 1)).reshape(9, c_out, c_in)  # (9,Cout,Cin)
    m = jnp.einsum("tab,tpq->bpaq", w_t, s)                            # (Cin,Pin,Cout,Pout)
    return m.reshape(c_in * p_in, c_out * p_out)


def _flat_bias(b, p_out):
    """(Cout,) -> (1, Cout*Pout) f32, bias repeated per spatial position."""
    c_out = b.shape[0]
    return jnp.broadcast_to(b.astype(jnp.float32)[:, None],
                            (c_out, p_out)).reshape(1, c_out * p_out)


# ----------------------------------------------------------------------------
# The fused encoder kernel: B_TILE images per grid step, 4 dense MXU matmuls.
# ----------------------------------------------------------------------------
def _encoder_kernel(x_ref, w1_ref, w2_ref, w3_ref, wfc_ref,
                    b1_ref, b2_ref, b3_ref, bfc_ref, o_ref):
    cd = x_ref.dtype  # matmul compute dtype (bf16 by default)

    def dense_relu(a_cd, w_ref, b_ref):
        h = jnp.dot(a_cd, w_ref[...], preferred_element_type=jnp.float32)
        return jnp.maximum(h + b_ref[...], 0.0)          # f32 bias + ReLU epilogue

    a1 = dense_relu(x_ref[...], w1_ref, b1_ref)          # (B_T, c_hid*64)   conv1 s=2
    a2 = dense_relu(a1.astype(cd), w2_ref, b2_ref)        # (B_T, c_hid*64)   conv2 s=1
    a3 = dense_relu(a2.astype(cd), w3_ref, b3_ref)        # (B_T, 2c_hid*16)  conv3 s=2
    out = jnp.dot(a3.astype(cd), wfc_ref[...],
                  preferred_element_type=jnp.float32)     # (B_T, LPAD) flatten+fc
    o_ref[...] = (out + bfc_ref[...]).astype(o_ref.dtype)


# ----------------------------------------------------------------------------
# Public forward pass (accepts NCHW input, PyTorch convention).
# ----------------------------------------------------------------------------
def encoder_forward(x_nchw, params, *, compute_dtype=jnp.bfloat16, batch_tile=128):
    B, c_in, H, W = x_nchw.shape
    assert H == 16 and W == 16, "Linear(2*16*c_hid, ...) implies a 16x16 input"
    c_hid = params["w1"].shape[0]
    latent = params["w_fc"].shape[1]
    cd = compute_dtype

    # Trace-time folded dense operators (K and N are multiples of 128 for
    # c_in=3, c_hid=8: 768/512/512/256/128).
    w1d = _fold_conv(params["w1"], 16, 16, 8, 8, 2).astype(cd)   # (Cin*256, c_hid*64)
    w2d = _fold_conv(params["w2"], 8, 8, 8, 8, 1).astype(cd)     # (c_hid*64, c_hid*64)
    w3d = _fold_conv(params["w3"], 8, 8, 4, 4, 2).astype(cd)     # (c_hid*64, 2c_hid*16)
    lpad = _round_up(latent, 128)                                # lane-dense output
    wfc = jnp.pad(params["w_fc"], ((0, 0), (0, lpad - latent))).astype(cd)
    b1 = _flat_bias(params["b1"], 64)
    b2 = _flat_bias(params["b2"], 64)
    b3 = _flat_bias(params["b3"], 16)
    bfc = jnp.pad(params["b_fc"], (0, lpad - latent)).reshape(1, lpad).astype(jnp.float32)

    # Input: NCHW flatten (channel-major) matches the folded operators' K layout.
    k1 = c_in * H * W
    bt = batch_tile if B >= batch_tile else _round_up(B, 16)
    b_pad = _round_up(B, bt)
    x = x_nchw.reshape(B, k1)
    x = jnp.pad(x, ((0, b_pad - B), (0, 0))).astype(cd)

    def full(a):
        return pl.BlockSpec(a.shape, lambda i: (0,) * a.ndim)

    out = pl.pallas_call(
        _encoder_kernel,
        out_shape=jax.ShapeDtypeStruct((b_pad, lpad), jnp.float32),
        grid=(b_pad // bt,),
        in_specs=[
            pl.BlockSpec((bt, k1), lambda i: (i, 0)),            # batch tile of images
            full(w1d), full(w2d), full(w3d), full(wfc),          # VMEM-resident weights
            full(b1), full(b2), full(b3), full(bfc),
        ],
        out_specs=pl.BlockSpec((bt, lpad), lambda i: (i, 0)),    # full-lane store
        compiler_params=pltpu.CompilerParams(
            dimension_semantics=("parallel",)),                  # shard batch on v7x TCs
    )(x, w1d, w2d, w3d, wfc, b1, b2, b3, bfc)
    return out[:B, :latent]


# ----------------------------------------------------------------------------
# Pure-JAX reference (for correctness checking).
# ----------------------------------------------------------------------------
def encoder_reference(x, params):
    dn = ("NCHW", "OIHW", "NCHW")
    a = jax.lax.conv_general_dilated(x, params["w1"], (2, 2), [(1, 1), (1, 1)],
                                     dimension_numbers=dn)
    a = jax.nn.relu(a + params["b1"].reshape(1, -1, 1, 1))
    a = jax.lax.conv_general_dilated(a, params["w2"], (1, 1), [(1, 1), (1, 1)],
                                     dimension_numbers=dn)
    a = jax.nn.relu(a + params["b2"].reshape(1, -1, 1, 1))
    a = jax.lax.conv_general_dilated(a, params["w3"], (2, 2), [(1, 1), (1, 1)],
                                     dimension_numbers=dn)
    a = jax.nn.relu(a + params["b3"].reshape(1, -1, 1, 1))
    a = a.reshape(a.shape[0], -1)                                 # NCHW flatten
    return a @ params["w_fc"] + params["b_fc"]


# ----------------------------------------------------------------------------
# Parameter init (PyTorch-style uniform fan-in init; w_fc stored (in, out)).
# ----------------------------------------------------------------------------
def init_params(key, num_input_channel, c_hid, latent_dim):
    ks = jax.random.split(key, 8)

    def u(k, shape, fan_in):
        bound = 1.0 / jnp.sqrt(fan_in)
        return jax.random.uniform(k, shape, jnp.float32, -bound, bound)

    p = {}
    p["w1"] = u(ks[0], (c_hid, num_input_channel, 3, 3), num_input_channel * 9)
    p["b1"] = u(ks[1], (c_hid,), num_input_channel * 9)
    p["w2"] = u(ks[2], (c_hid, c_hid, 3, 3), c_hid * 9)
    p["b2"] = u(ks[3], (c_hid,), c_hid * 9)
    p["w3"] = u(ks[4], (2 * c_hid, c_hid, 3, 3), c_hid * 9)
    p["b3"] = u(ks[5], (2 * c_hid,), c_hid * 9)
    fc_in = 2 * 16 * c_hid
    p["w_fc"] = u(ks[6], (fc_in, latent_dim), fc_in)
    p["b_fc"] = u(ks[7], (latent_dim,), fc_in)
    return p


if __name__ == "__main__":
    # The module implies a 16x16 spatial input (two stride-2 convs -> 4x4 and
    # Linear expects 2*16*c_hid features).
    batch = 2
    num_input_channel = 3
    base_channel_size = 8
    latent_dim = 32

    key = jax.random.PRNGKey(0)
    k_x, k_p = jax.random.split(key)
    x = jax.random.normal(k_x, (batch, num_input_channel, 16, 16), jnp.float32)
    params = init_params(k_p, num_input_channel, base_channel_size, latent_dim)

    # f32 compute path: check against the pure-JAX reference.
    f32_fwd = jax.jit(functools.partial(encoder_forward, compute_dtype=jnp.float32))
    out_f32 = jax.block_until_ready(f32_fwd(x, params))
    ref = jax.block_until_ready(encoder_reference(x, params))
    assert out_f32.shape == (batch, latent_dim), out_f32.shape
    assert jnp.allclose(out_f32, ref, atol=5e-3, rtol=5e-2), \
        float(jnp.max(jnp.abs(out_f32 - ref)))

    # Default bf16 MXU path.
    out_bf16 = jax.block_until_ready(jax.jit(encoder_forward)(x, params))
    assert out_bf16.shape == (batch, latent_dim), out_bf16.shape

    print("KERNEL_OK")
</pallas_src>

<mosaic_0001>
module attributes {stable_mosaic.version = 11 : i64} {
  func.func @_encoder_kernel(%arg0: i32, %arg1: memref<16x768xf32, #tpu.memory_space<vmem>>, %arg2: memref<768x512xf32, #tpu.memory_space<vmem>>, %arg3: memref<512x512xf32, #tpu.memory_space<vmem>>, %arg4: memref<512x256xf32, #tpu.memory_space<vmem>>, %arg5: memref<256x128xf32, #tpu.memory_space<vmem>>, %arg6: memref<1x512xf32, #tpu.memory_space<vmem>>, %arg7: memref<1x512xf32, #tpu.memory_space<vmem>>, %arg8: memref<1x256xf32, #tpu.memory_space<vmem>>, %arg9: memref<1x128xf32, #tpu.memory_space<vmem>>, %arg10: memref<16x128xf32, #tpu.memory_space<vmem>>) attributes {dimension_semantics = [#tpu.dimension_semantics<parallel>], iteration_bounds = array<i64: 1>, scalar_prefetch = 0 : i64, scratch_operands = 0 : i64, tpu.core_type = #tpu.core_type<tc>, window_params = [{transform_indices = @transform_0, window_bounds = array<i64: 16, 768>}, {pipeline_mode = #tpu.pipeline_mode<synchronous>, transform_indices = @transform_1, window_bounds = array<i64: 768, 512>}, {pipeline_mode = #tpu.pipeline_mode<synchronous>, transform_indices = @transform_2, window_bounds = array<i64: 512, 512>}, {pipeline_mode = #tpu.pipeline_mode<synchronous>, transform_indices = @transform_3, window_bounds = array<i64: 512, 256>}, {pipeline_mode = #tpu.pipeline_mode<synchronous>, transform_indices = @transform_4, window_bounds = array<i64: 256, 128>}, {pipeline_mode = #tpu.pipeline_mode<synchronous>, transform_indices = @transform_5, window_bounds = array<i64: 1, 512>}, {pipeline_mode = #tpu.pipeline_mode<synchronous>, transform_indices = @transform_6, window_bounds = array<i64: 1, 512>}, {pipeline_mode = #tpu.pipeline_mode<synchronous>, transform_indices = @transform_7, window_bounds = array<i64: 1, 256>}, {pipeline_mode = #tpu.pipeline_mode<synchronous>, transform_indices = @transform_8, window_bounds = array<i64: 1, 128>}, {transform_indices = @transform_9, window_bounds = array<i64: 16, 128>}]} {
    %c0 = arith.constant 0 : index
    %c0_0 = arith.constant 0 : index
    %0 = vector.load %arg1[%c0, %c0_0] : memref<16x768xf32, #tpu.memory_space<vmem>>, vector<16x768xf32>
    %c0_1 = arith.constant 0 : index
    %c0_2 = arith.constant 0 : index
    %1 = vector.load %arg2[%c0_1, %c0_2] : memref<768x512xf32, #tpu.memory_space<vmem>>, vector<768x512xf32>
    %cst = arith.constant dense<0.000000e+00> : vector<16x512xf32>
    %2 = tpu.matmul %0, %1, %cst {dimension_numbers = #tpu.dot_dimension_numbers<[1], [0], [0], [1], [0, 0, 1, 1], [], []>} : vector<16x768xf32>, vector<768x512xf32>, vector<16x512xf32> -> vector<16x512xf32>
    %c0_3 = arith.constant 0 : index
    %c0_4 = arith.constant 0 : index
    %3 = vector.load %arg6[%c0_3, %c0_4] : memref<1x512xf32, #tpu.memory_space<vmem>>, vector<1x512xf32>
    %4 = vector.broadcast %3 : vector<1x512xf32> to vector<16x512xf32>
    %5 = arith.addf %2, %4 : vector<16x512xf32>
    %cst_5 = arith.constant 0.000000e+00 : f32
    %6 = vector.broadcast %cst_5 : f32 to vector<16x512xf32>
    %7 = arith.maximumf %5, %6 : vector<16x512xf32>
    %c0_6 = arith.constant 0 : index
    %c0_7 = arith.constant 0 : index
    %8 = vector.load %arg3[%c0_6, %c0_7] : memref<512x512xf32, #tpu.memory_space<vmem>>, vector<512x512xf32>
    %cst_8 = arith.constant dense<0.000000e+00> : vector<16x512xf32>
    %9 = tpu.matmul %7, %8, %cst_8 {dimension_numbers = #tpu.dot_dimension_numbers<[1], [0], [0], [1], [0, 0, 1, 1], [], []>} : vector<16x512xf32>, vector<512x512xf32>, vector<16x512xf32> -> vector<16x512xf32>
    %c0_9 = arith.constant 0 : index
    %c0_10 = arith.constant 0 : index
    %10 = vector.load %arg7[%c0_9, %c0_10] : memref<1x512xf32, #tpu.memory_space<vmem>>, vector<1x512xf32>
    %11 = vector.broadcast %10 : vector<1x512xf32> to vector<16x512xf32>
    %12 = arith.addf %9, %11 : vector<16x512xf32>
    %cst_11 = arith.constant 0.000000e+00 : f32
    %13 = vector.broadcast %cst_11 : f32 to vector<16x512xf32>
    %14 = arith.maximumf %12, %13 : vector<16x512xf32>
    %c0_12 = arith.constant 0 : index
    %c0_13 = arith.constant 0 : index
    %15 = vector.load %arg4[%c0_12, %c0_13] : memref<512x256xf32, #tpu.memory_space<vmem>>, vector<512x256xf32>
    %cst_14 = arith.constant dense<0.000000e+00> : vector<16x256xf32>
    %16 = tpu.matmul %14, %15, %cst_14 {dimension_numbers = #tpu.dot_dimension_numbers<[1], [0], [0], [1], [0, 0, 1, 1], [], []>} : vector<16x512xf32>, vector<512x256xf32>, vector<16x256xf32> -> vector<16x256xf32>
    %c0_15 = arith.constant 0 : index
    %c0_16 = arith.constant 0 : index
    %17 = vector.load %arg8[%c0_15, %c0_16] : memref<1x256xf32, #tpu.memory_space<vmem>>, vector<1x256xf32>
    %18 = vector.broadcast %17 : vector<1x256xf32> to vector<16x256xf32>
    %19 = arith.addf %16, %18 : vector<16x256xf32>
    %cst_17 = arith.constant 0.000000e+00 : f32
    %20 = vector.broadcast %cst_17 : f32 to vector<16x256xf32>
    %21 = arith.maximumf %19, %20 : vector<16x256xf32>
    %c0_18 = arith.constant 0 : index
    %c0_19 = arith.constant 0 : index
    %22 = vector.load %arg5[%c0_18, %c0_19] : memref<256x128xf32, #tpu.memory_space<vmem>>, vector<256x128xf32>
    %cst_20 = arith.constant dense<0.000000e+00> : vector<16x128xf32>
    %23 = tpu.matmul %21, %22, %cst_20 {dimension_numbers = #tpu.dot_dimension_numbers<[1], [0], [0], [1], [0, 0, 1, 1], [], []>} : vector<16x256xf32>, vector<256x128xf32>, vector<16x128xf32> -> vector<16x128xf32>
    %c0_21 = arith.constant 0 : index
    %c0_22 = arith.constant 0 : index
    %24 = vector.load %arg9[%c0_21, %c0_22] : memref<1x128xf32, #tpu.memory_space<vmem>>, vector<1x128xf32>
    %25 = vector.broadcast %24 : vector<1x128xf32> to vector<16x128xf32>
    %26 = arith.addf %23, %25 : vector<16x128xf32>
    %c0_23 = arith.constant 0 : index
    %c0_24 = arith.constant 0 : index
    %27 = vector.load %arg10[%c0_23, %c0_24] : memref<16x128xf32, #tpu.memory_space<vmem>>, vector<16x128xf32>
    tpu.vector_store %arg10[%c0_23, %c0_24], %26 {strides = array<i32>} : memref<16x128xf32, #tpu.memory_space<vmem>>, vector<16x128xf32>,
    return
  }
  func.func @transform_0(%arg0: i32) -> (i32, i32) {
    %c0_i32 = arith.constant 0 : i32
    %c0_i32_0 = arith.constant 0 : i32
    return %arg0, %c0_i32 : i32, i32
  }
  func.func @transform_1(%arg0: i32) -> (i32, i32) {
    %c0_i32 = arith.constant 0 : i32
    %c0_i32_0 = arith.constant 0 : i32
    %c0_i32_1 = arith.constant 0 : i32
    return %c0_i32, %c0_i32_0 : i32, i32
  }
  func.func @transform_2(%arg0: i32) -> (i32, i32) {
    %c0_i32 = arith.constant 0 : i32
    %c0_i32_0 = arith.constant 0 : i32
    %c0_i32_1 = arith.constant 0 : i32
    return %c0_i32, %c0_i32_0 : i32, i32
  }
  func.func @transform_3(%arg0: i32) -> (i32, i32) {
    %c0_i32 = arith.constant 0 : i32
    %c0_i32_0 = arith.constant 0 : i32
    %c0_i32_1 = arith.constant 0 : i32
    return %c0_i32, %c0_i32_0 : i32, i32
  }
  func.func @transform_4(%arg0: i32) -> (i32, i32) {
    %c0_i32 = arith.constant 0 : i32
    %c0_i32_0 = arith.constant 0 : i32
    %c0_i32_1 = arith.constant 0 : i32
    return %c0_i32, %c0_i32_0 : i32, i32
  }
  func.func @transform_5(%arg0: i32) -> (i32, i32) {
    %c0_i32 = arith.constant 0 : i32
    %c0_i32_0 = arith.constant 0 : i32
    %c0_i32_1 = arith.constant 0 : i32
    return %c0_i32, %c0_i32_0 : i32, i32
  }
  func.func @transform_6(%arg0: i32) -> (i32, i32) {
    %c0_i32 = arith.constant 0 : i32
    %c0_i32_0 = arith.constant 0 : i32
    %c0_i32_1 = arith.constant 0 : i32
    return %c0_i32, %c0_i32_0 : i32, i32
  }
  func.func @transform_7(%arg0: i32) -> (i32, i32) {
    %c0_i32 = arith.constant 0 : i32
    %c0_i32_0 = arith.constant 0 : i32
    %c0_i32_1 = arith.constant 0 : i32
    return %c0_i32, %c0_i32_0 : i32, i32
  }
  func.func @transform_8(%arg0: i32) -> (i32, i32) {
    %c0_i32 = arith.constant 0 : i32
    %c0_i32_0 = arith.constant 0 : i32
    %c0_i32_1 = arith.constant 0 : i32
    return %c0_i32, %c0_i32_0 : i32, i32
  }
  func.func @transform_9(%arg0: i32) -> (i32, i32) {
    %c0_i32 = arith.constant 0 : i32
    %c0_i32_0 = arith.constant 0 : i32
    return %arg0, %c0_i32 : i32, i32
  }
}

</mosaic_0001>

<llo_original>
// kernel: encoder_forward.1
$region0: #{encoder_forward.1}
  #allocation0 [shape = 'u32[]', space=smem, size = 0x4, offset = 0x4, fixed_abs, tag = 'smem constant byte address 0x4 - core index']
  #allocation1 [shape = 'u32[144,128]{1,0:T(1,128)}', space=vmem, size = 0x12000, scoped, tag = 'internal scratch']
  %s0 = inlined_call_operand.vmem [shape: f32[16,768], index: 0, kind: input, shape index: {}]
  %s1 = inlined_call_operand.vmem [shape: f32[768,512], index: 1, kind: input, shape index: {}]
  %s2 = inlined_call_operand.vmem [shape: f32[512,512], index: 2, kind: input, shape index: {}]
  %s3 = inlined_call_operand.vmem [shape: f32[512,256], index: 3, kind: input, shape index: {}]
  %s4 = inlined_call_operand.vmem [shape: f32[256,128], index: 4, kind: input, shape index: {}]
  %s5 = inlined_call_operand.vmem [shape: f32[1,512], index: 5, kind: input, shape index: {}]
  %s6 = inlined_call_operand.vmem [shape: f32[1,512], index: 6, kind: input, shape index: {}]
  %s7 = inlined_call_operand.vmem [shape: f32[1,256], index: 7, kind: input, shape index: {}]
  %s8 = inlined_call_operand.vmem [shape: f32[1,128], index: 8, kind: input, shape index: {}]
  %s9 = inlined_call_operand.vmem [shape: f32[16,128], index: 9, kind: output, shape index: {}]
  %s10 = sld [smem:[#allocation0]]
  $region46: #{encoder_forward.1} parent=0
    _
  %s12 = ssub.s32 1, %s10
  %s13 = scalar_select 0, %s12, %s10
  // Predicated region
  $region2: #{encoder_forward.1} parent=0 // pred_check
    _
  $region3: #{encoder_forward.1} parent=0 // pred_check_branch
    %15 = sbr.rel (0) target = $region5
  $region4: #{encoder_forward.1} parent=0 // pred_region
    _
  $region5: #{encoder_forward.1} parent=0 // pred_fallthru
    _
  // Predicated region
  $region6: #{encoder_forward.1} parent=0 // pred_check
    _
  $region7: #{encoder_forward.1} parent=0 // pred_check_branch
    %17 = sbr.rel (0) target = $region9
  $region8: #{encoder_forward.1} parent=0 // pred_region
    _
  $region9: #{encoder_forward.1} parent=0 // pred_fallthru
    _
  // Predicated region
  $region10: #{encoder_forward.1} parent=0 // pred_check
    _
  $region11: #{encoder_forward.1} parent=0 // pred_check_branch
    %19 = sbr.rel (0) target = $region13
  $region12: #{encoder_forward.1} parent=0 // pred_region
    _
  $region13: #{encoder_forward.1} parent=0 // pred_fallthru
    _
  // Predicated region
  $region14: #{encoder_forward.1} parent=0 // pred_check
    _
  $region15: #{encoder_forward.1} parent=0 // pred_check_branch
    %21 = sbr.rel (0) target = $region17
  $region16: #{encoder_forward.1} parent=0 // pred_region
    _
  $region17: #{encoder_forward.1} parent=0 // pred_fallthru
    _
  // Predicated region
  $region18: #{encoder_forward.1} parent=0 // pred_check
    _
  $region19: #{encoder_forward.1} parent=0 // pred_check_branch
    %23 = sbr.rel (0) target = $region21
  $region20: #{encoder_forward.1} parent=0 // pred_region
    _
  $region21: #{encoder_forward.1} parent=0 // pred_fallthru
    _
  // Predicated region
  $region22: #{encoder_forward.1} parent=0 // pred_check
    _
  $region23: #{encoder_forward.1} parent=0 // pred_check_branch
    %25 = sbr.rel (0) target = $region25
  $region24: #{encoder_forward.1} parent=0 // pred_region
    _
  $region25: #{encoder_forward.1} parent=0 // pred_fallthru
    _
  // Predicated region
  $region26: #{encoder_forward.1} parent=0 // pred_check
    _
  $region27: #{encoder_forward.1} parent=0 // pred_check_branch
    %27 = sbr.rel (0) target = $region29
  $region28: #{encoder_forward.1} parent=0 // pred_region
    _
  $region29: #{encoder_forward.1} parent=0 // pred_fallthru
    _
  // Predicated region
  $region30: #{encoder_forward.1} parent=0 // pred_check
    _
  $region31: #{encoder_forward.1} parent=0 // pred_check_branch
    %29 = sbr.rel (0) target = $region33
  $region32: #{encoder_forward.1} parent=0 // pred_region
    _
  $region33: #{encoder_forward.1} parent=0 // pred_fallthru
    _
  // Predicated region
  $region34: #{encoder_forward.1} parent=0 // pred_check
    _
  $region35: #{encoder_forward.1} parent=0 // pred_check_branch
    %31 = sbr.rel (0) target = $region37
  $region36: #{encoder_forward.1} parent=0 // pred_region
    _
  $region37: #{encoder_forward.1} parent=0 // pred_fallthru
    _
  %v32 = vld [vmem:[%s0] sm:$0xff]
  %v33 = vld [vmem:[%s0 + $0x8] sm:$0xff]
  %v34 = vld [vmem:[%s0 + $0x10] sm:$0xff]
  %v35 = vld [vmem:[%s0 + $0x18] sm:$0xff]
  %v36 = vld [vmem:[%s0 + $0x20] sm:$0xff]
  %v37 = vld [vmem:[%s0 + $0x28] sm:$0xff]
  %v38 = vld [vmem:[%s0 + $0x30] sm:$0xff]
  %v39 = vld [vmem:[%s0 + $0x38] sm:$0xff]
  %v40 = vld [vmem:[%s0 + $0x40] sm:$0xff]
  %v41 = vld [vmem:[%s0 + $0x48] sm:$0xff]
  %v42 = vld [vmem:[%s0 + $0x50] sm:$0xff]
  %v43 = vld [vmem:[%s0 + $0x58] sm:$0xff]
  %v44 = vld [vmem:[%s1] sm:$0xff]
  %v45 = vld [vmem:[%s1 + $0x8] sm:$0xff]
  %v46 = vld [vmem:[%s1 + $0x10] sm:$0xff]
  %v47 = vld [vmem:[%s1 + $0x18] sm:$0xff]
  %v48 = vld [vmem:[%s1 + $0x20] sm:$0xff]
  %v49 = vld [vmem:[%s1 + $0x28] sm:$0xff]
  %v50 = vld [vmem:[%s1 + $0x30] sm:$0xff]
  %v51 = vld [vmem:[%s1 + $0x38] sm:$0xff]
  %v52 = vld [vmem:[%s1 + $0x40] sm:$0xff]
  %v53 = vld [vmem:[%s1 + $0x48] sm:$0xff]
  %v54 = vld [vmem:[%s1 + $0x50] sm:$0xff]
  %v55 = vld [vmem:[%s1 + $0x58] sm:$0xff]
  %v56 = vld [vmem:[%s1 + $0x60] sm:$0xff]
  %v57 = vld [vmem:[%s1 + $0x68] sm:$0xff]
  %v58 = vld [vmem:[%s1 + $0x70] sm:$0xff]
  %v59 = vld [vmem:[%s1 + $0x78] sm:$0xff]
  %v60 = vld [vmem:[%s1 + $0x80] sm:$0xff]
  %v61 = vld [vmem:[%s1 + $0x88] sm:$0xff]
  %v62 = vld [vmem:[%s1 + $0x90] sm:$0xff]
  %v63 = vld [vmem:[%s1 + $0x98] sm:$0xff]
  %v64 = vld [vmem:[%s1 + $0xa0] sm:$0xff]
  %v65 = vld [vmem:[%s1 + $0xa8] sm:$0xff]
  %v66 = vld [vmem:[%s1 + $0xb0] sm:$0xff]
  %v67 = vld [vmem:[%s1 + $0xb8] sm:$0xff]
  %v68 = vld [vmem:[%s1 + $0xc0] sm:$0xff]
  %v69 = vld [vmem:[%s1 + $0xc8] sm:$0xff]
  %v70 = vld [vmem:[%s1 + $0xd0] sm:$0xff]
  %v71 = vld [vmem:[%s1 + $0xd8] sm:$0xff]
  %v72 = vld [vmem:[%s1 + $0xe0] sm:$0xff]
  %v73 = vld [vmem:[%s1 + $0xe8] sm:$0xff]
  %v74 = vld [vmem:[%s1 + $0xf0] sm:$0xff]
  %v75 = vld [vmem:[%s1 + $0xf8] sm:$0xff]
  %v76 = vld [vmem:[%s1 + $0x100] sm:$0xff]
  %v77 = vld [vmem:[%s1 + $0x108] sm:$0xff]
  %v78 = vld [vmem:[%s1 + $0x110] sm:$0xff]
  %v79 = vld [vmem:[%s1 + $0x118] sm:$0xff]
  %v80 = vld [vmem:[%s1 + $0x120] sm:$0xff]
  %v81 = vld [vmem:[%s1 + $0x128] sm:$0xff]
  %v82 = vld [vmem:[%s1 + $0x130] sm:$0xff]
  %v83 = vld [vmem:[%s1 + $0x138] sm:$0xff]
  %v84 = vld [vmem:[%s1 + $0x140] sm:$0xff]
  %v85 = vld [vmem:[%s1 + $0x148] sm:$0xff]
  %v86 = vld [vmem:[%s1 + $0x150] sm:$0xff]
  %v87 = vld [vmem:[%s1 + $0x158] sm:$0xff]
  %v88 = vld [vmem:[%s1 + $0x160] sm:$0xff]
  %v89 = vld [vmem:[%s1 + $0x168] sm:$0xff]
  %v90 = vld [vmem:[%s1 + $0x170] sm:$0xff]
  %v91 = vld [vmem:[%s1 + $0x178] sm:$0xff]
  %v92 = vld [vmem:[%s1 + $0x180] sm:$0xff]
  %v93 = vld [vmem:[%s1 + $0x188] sm:$0xff]
  %v94 = vld [vmem:[%s1 + $0x190] sm:$0xff]
  %v95 = vld [vmem:[%s1 + $0x198] sm:$0xff]
  %v96 = vld [vmem:[%s1 + $0x1a0] sm:$0xff]
  %v97 = vld [vmem:[%s1 + $0x1a8] sm:$0xff]
  %v98 = vld [vmem:[%s1 + $0x1b0] sm:$0xff]
  %v99 = vld [vmem:[%s1 + $0x1b8] sm:$0xff]
  %v100 = vld [vmem:[%s1 + $0x1c0] sm:$0xff]
  %v101 = vld [vmem:[%s1 + $0x1c8] sm:$0xff]
  %v102 = vld [vmem:[%s1 + $0x1d0] sm:$0xff]
  %v103 = vld [vmem:[%s1 + $0x1d8] sm:$0xff]
  %v104 = vld [vmem:[%s1 + $0x1e0] sm:$0xff]
  %v105 = vld [vmem:[%s1 + $0x1e8] sm:$0xff]
  %v106 = vld [vmem:[%s1 + $0x1f0] sm:$0xff]
  %v107 = vld [vmem:[%s1 + $0x1f8] sm:$0xff]
  %v108 = vld [vmem:[%s1 + $0x200] sm:$0xff]
  %v109 = vld [vmem:[%s1 + $0x208] sm:$0xff]
  %v110 = vld [vmem:[%s1 + $0x210] sm:$0xff]
  %v111 = vld [vmem:[%s1 + $0x218] sm:$0xff]
  %v112 = vld [vmem:[%s1 + $0x220] sm:$0xff]
  %v113 = vld [vmem:[%s1 + $0x228] sm:$0xff]
  %v114 = vld [vmem:[%s1 + $0x230] sm:$0xff]
  %v115 = vld [vmem:[%s1 + $0x238] sm:$0xff]
  %v116 = vld [vmem:[%s1 + $0x240] sm:$0xff]
  %v117 = vld [vmem:[%s1 + $0x248] sm:$0xff]
  %v118 = vld [vmem:[%s1 + $0x250] sm:$0xff]
  %v119 = vld [vmem:[%s1 + $0x258] sm:$0xff]
  %v120 = vld [vmem:[%s1 + $0x260] sm:$0xff]
  %v121 = vld [vmem:[%s1 + $0x268] sm:$0xff]
  %v122 = vld [vmem:[%s1 + $0x270] sm:$0xff]
  %v123 = vld [vmem:[%s1 + $0x278] sm:$0xff]
  %v124 = vld [vmem:[%s1 + $0x280] sm:$0xff]
  %v125 = vld [vmem:[%s1 + $0x288] sm:$0xff]
  %v126 = vld [vmem:[%s1 + $0x290] sm:$0xff]
  %v127 = vld [vmem:[%s1 + $0x298] sm:$0xff]
  %v128 = vld [vmem:[%s1 + $0x2a0] sm:$0xff]
  %v129 = vld [vmem:[%s1 + $0x2a8] sm:$0xff]
  %v130 = vld [vmem:[%s1 + $0x2b0] sm:$0xff]
  %v131 = vld [vmem:[%s1 + $0x2b8] sm:$0xff]
  %v132 = vld [vmem:[%s1 + $0x2c0] sm:$0xff]
  %v133 = vld [vmem:[%s1 + $0x2c8] sm:$0xff]
  %v134 = vld [vmem:[%s1 + $0x2d0] sm:$0xff]
  %v135 = vld [vmem:[%s1 + $0x2d8] sm:$0xff]
  %v136 = vld [vmem:[%s1 + $0x2e0] sm:$0xff]
  %v137 = vld [vmem:[%s1 + $0x2e8] sm:$0xff]
  %v138 = vld [vmem:[%s1 + $0x2f0] sm:$0xff]
  %v139 = vld [vmem:[%s1 + $0x2f8] sm:$0xff]
  %v140 = vld [vmem:[%s1 + $0x300] sm:$0xff]
  %v141 = vld [vmem:[%s1 + $0x308] sm:$0xff]
  %v142 = vld [vmem:[%s1 + $0x310] sm:$0xff]
  %v143 = vld [vmem:[%s1 + $0x318] sm:$0xff]
  %v144 = vld [vmem:[%s1 + $0x320] sm:$0xff]
  %v145 = vld [vmem:[%s1 + $0x328] sm:$0xff]
  %v146 = vld [vmem:[%s1 + $0x330] sm:$0xff]
  %v147 = vld [vmem:[%s1 + $0x338] sm:$0xff]
  %v148 = vld [vmem:[%s1 + $0x340] sm:$0xff]
  %v149 = vld [vmem:[%s1 + $0x348] sm:$0xff]
  %v150 = vld [vmem:[%s1 + $0x350] sm:$0xff]
  %v151 = vld [vmem:[%s1 + $0x358] sm:$0xff]
  %v152 = vld [vmem:[%s1 + $0x360] sm:$0xff]
  %v153 = vld [vmem:[%s1 + $0x368] sm:$0xff]
  %v154 = vld [vmem:[%s1 + $0x370] sm:$0xff]
  %v155 = vld [vmem:[%s1 + $0x378] sm:$0xff]
  %v156 = vld [vmem:[%s1 + $0x380] sm:$0xff]
  %v157 = vld [vmem:[%s1 + $0x388] sm:$0xff]
  %v158 = vld [vmem:[%s1 + $0x390] sm:$0xff]
  %v159 = vld [vmem:[%s1 + $0x398] sm:$0xff]
  %v160 = vld [vmem:[%s1 + $0x3a0] sm:$0xff]
  %v161 = vld [vmem:[%s1 + $0x3a8] sm:$0xff]
  %v162 = vld [vmem:[%s1 + $0x3b0] sm:$0xff]
  %v163 = vld [vmem:[%s1 + $0x3b8] sm:$0xff]
  %v164 = vld [vmem:[%s1 + $0x3c0] sm:$0xff]
  %v165 = vld [vmem:[%s1 + $0x3c8] sm:$0xff]
  %v166 = vld [vmem:[%s1 + $0x3d0] sm:$0xff]
  %v167 = vld [vmem:[%s1 + $0x3d8] sm:$0xff]
  %v168 = vld [vmem:[%s1 + $0x3e0] sm:$0xff]
  %v169 = vld [vmem:[%s1 + $0x3e8] sm:$0xff]
  %v170 = vld [vmem:[%s1 + $0x3f0] sm:$0xff]
  %v171 = vld [vmem:[%s1 + $0x3f8] sm:$0xff]
  %v172 = vld [vmem:[%s1 + $0x400] sm:$0xff]
  %v173 = vld [vmem:[%s1 + $0x408] sm:$0xff]
  %v174 = vld [vmem:[%s1 + $0x410] sm:$0xff]
  %v175 = vld [vmem:[%s1 + $0x418] sm:$0xff]
  %v176 = vld [vmem:[%s1 + $0x420] sm:$0xff]
  %v177 = vld [vmem:[%s1 + $0x428] sm:$0xff]
  %v178 = vld [vmem:[%s1 + $0x430] sm:$0xff]
  %v179 = vld [vmem:[%s1 + $0x438] sm:$0xff]
  %v180 = vld [vmem:[%s1 + $0x440] sm:$0xff]
  %v181 = vld [vmem:[%s1 + $0x448] sm:$0xff]
  %v182 = vld [vmem:[%s1 + $0x450] sm:$0xff]
  %v183 = vld [vmem:[%s1 + $0x458] sm:$0xff]
  %v184 = vld [vmem:[%s1 + $0x460] sm:$0xff]
  %v185 = vld [vmem:[%s1 + $0x468] sm:$0xff]
  %v186 = vld [vmem:[%s1 + $0x470] sm:$0xff]
  %v187 = vld [vmem:[%s1 + $0x478] sm:$0xff]
  %v188 = vld [vmem:[%s1 + $0x480] sm:$0xff]
  %v189 = vld [vmem:[%s1 + $0x488] sm:$0xff]
  %v190 = vld [vmem:[%s1 + $0x490] sm:$0xff]
  %v191 = vld [vmem:[%s1 + $0x498] sm:$0xff]
  %v192 = vld [vmem:[%s1 + $0x4a0] sm:$0xff]
  %v193 = vld [vmem:[%s1 + $0x4a8] sm:$0xff]
  %v194 = vld [vmem:[%s1 + $0x4b0] sm:$0xff]
  %v195 = vld [vmem:[%s1 + $0x4b8] sm:$0xff]
  %v196 = vld [vmem:[%s1 + $0x4c0] sm:$0xff]
  %v197 = vld [vmem:[%s1 + $0x4c8] sm:$0xff]
  %v198 = vld [vmem:[%s1 + $0x4d0] sm:$0xff]
  %v199 = vld [vmem:[%s1 + $0x4d8] sm:$0xff]
  %v200 = vld [vmem:[%s1 + $0x4e0] sm:$0xff]
  %v201 = vld [vmem:[%s1 + $0x4e8] sm:$0xff]
  %v202 = vld [vmem:[%s1 + $0x4f0] sm:$0xff]
  %v203 = vld [vmem:[%s1 + $0x4f8] sm:$0xff]
  %v204 = vld [vmem:[%s1 + $0x500] sm:$0xff]
  %v205 = vld [vmem:[%s1 + $0x508] sm:$0xff]
  %v206 = vld [vmem:[%s1 + $0x510] sm:$0xff]
  %v207 = vld [vmem:[%s1 + $0x518] sm:$0xff]
  %v208 = vld [vmem:[%s1 + $0x520] sm:$0xff]
  %v209 = vld [vmem:[%s1 + $0x528] sm:$0xff]
  %v210 = vld [vmem:[%s1 + $0x530] sm:$0xff]
  %v211 = vld [vmem:[%s1 + $0x538] sm:$0xff]
  %v212 = vld [vmem:[%s1 + $0x540] sm:$0xff]
  %v213 = vld [vmem:[%s1 + $0x548] sm:$0xff]
  %v214 = vld [vmem:[%s1 + $0x550] sm:$0xff]
  %v215 = vld [vmem:[%s1 + $0x558] sm:$0xff]
  %v216 = vld [vmem:[%s1 + $0x560] sm:$0xff]
  %v217 = vld [vmem:[%s1 + $0x568] sm:$0xff]
  %v218 = vld [vmem:[%s1 + $0x570] sm:$0xff]
  %v219 = vld [vmem:[%s1 + $0x578] sm:$0xff]
  %v220 = vld [vmem:[%s1 + $0x580] sm:$0xff]
  %v221 = vld [vmem:[%s1 + $0x588] sm:$0xff]
  %v222 = vld [vmem:[%s1 + $0x590] sm:$0xff]
  %v223 = vld [vmem:[%s1 + $0x598] sm:$0xff]
  %v224 = vld [vmem:[%s1 + $0x5a0] sm:$0xff]
  %v225 = vld [vmem:[%s1 + $0x5a8] sm:$0xff]
  %v226 = vld [vmem:[%s1 + $0x5b0] sm:$0xff]
  %v227 = vld [vmem:[%s1 + $0x5b8] sm:$0xff]
  %v228 = vld [vmem:[%s1 + $0x5c0] sm:$0xff]
  %v229 = vld [vmem:[%s1 + $0x5c8] sm:$0xff]
  %v230 = vld [vmem:[%s1 + $0x5d0] sm:$0xff]
  %v231 = vld [vmem:[%s1 + $0x5d8] sm:$0xff]
  %v232 = vld [vmem:[%s1 + $0x5e0] sm:$0xff]
  %v233 = vld [vmem:[%s1 + $0x5e8] sm:$0xff]
  %v234 = vld [vmem:[%s1 + $0x5f0] sm:$0xff]
  %v235 = vld [vmem:[%s1 + $0x5f8] sm:$0xff]
  %v236 = vld [vmem:[%s1 + $0x600] sm:$0xff]
  %v237 = vld [vmem:[%s1 + $0x608] sm:$0xff]
  %v238 = vld [vmem:[%s1 + $0x610] sm:$0xff]
  %v239 = vld [vmem:[%s1 + $0x618] sm:$0xff]
  %v240 = vld [vmem:[%s1 + $0x620] sm:$0xff]
  %v241 = vld [vmem:[%s1 + $0x628] sm:$0xff]
  %v242 = vld [vmem:[%s1 + $0x630] sm:$0xff]
  %v243 = vld [vmem:[%s1 + $0x638] sm:$0xff]
  %v244 = vld [vmem:[%s1 + $0x640] sm:$0xff]
  %v245 = vld [vmem:[%s1 + $0x648] sm:$0xff]
  %v246 = vld [vmem:[%s1 + $0x650] sm:$0xff]
  %v247 = vld [vmem:[%s1 + $0x658] sm:$0xff]
  %v248 = vld [vmem:[%s1 + $0x660] sm:$0xff]
  %v249 = vld [vmem:[%s1 + $0x668] sm:$0xff]
  %v250 = vld [vmem:[%s1 + $0x670] sm:$0xff]
  %v251 = vld [vmem:[%s1 + $0x678] sm:$0xff]
  %v252 = vld [vmem:[%s1 + $0x680] sm:$0xff]
  %v253 = vld [vmem:[%s1 + $0x688] sm:$0xff]
  %v254 = vld [vmem:[%s1 + $0x690] sm:$0xff]
  %v255 = vld [vmem:[%s1 + $0x698] sm:$0xff]
  %v256 = vld [vmem:[%s1 + $0x6a0] sm:$0xff]
  %v257 = vld [vmem:[%s1 + $0x6a8] sm:$0xff]
  %v258 = vld [vmem:[%s1 + $0x6b0] sm:$0xff]
  %v259 = vld [vmem:[%s1 + $0x6b8] sm:$0xff]
  %v260 = vld [vmem:[%s1 + $0x6c0] sm:$0xff]
  %v261 = vld [vmem:[%s1 + $0x6c8] sm:$0xff]
  %v262 = vld [vmem:[%s1 + $0x6d0] sm:$0xff]
  %v263 = vld [vmem:[%s1 + $0x6d8] sm:$0xff]
  %v264 = vld [vmem:[%s1 + $0x6e0] sm:$0xff]
  %v265 = vld [vmem:[%s1 + $0x6e8] sm:$0xff]
  %v266 = vld [vmem:[%s1 + $0x6f0] sm:$0xff]
  %v267 = vld [vmem:[%s1 + $0x6f8] sm:$0xff]
  %v268 = vld [vmem:[%s1 + $0x700] sm:$0xff]
  %v269 = vld [vmem:[%s1 + $0x708] sm:$0xff]
  %v270 = vld [vmem:[%s1 + $0x710] sm:$0xff]
  %v271 = vld [vmem:[%s1 + $0x718] sm:$0xff]
  %v272 = vld [vmem:[%s1 + $0x720] sm:$0xff]
  %v273 = vld [vmem:[%s1 + $0x728] sm:$0xff]
  %v274 = vld [vmem:[%s1 + $0x730] sm:$0xff]
  %v275 = vld [vmem:[%s1 + $0x738] sm:$0xff]
  %v276 = vld [vmem:[%s1 + $0x740] sm:$0xff]
  %v277 = vld [vmem:[%s1 + $0x748] sm:$0xff]
  %v278 = vld [vmem:[%s1 + $0x750] sm:$0xff]
  %v279 = vld [vmem:[%s1 + $0x758] sm:$0xff]
  %v280 = vld [vmem:[%s1 + $0x760] sm:$0xff]
  %v281 = vld [vmem:[%s1 + $0x768] sm:$0xff]
  %v282 = vld [vmem:[%s1 + $0x770] sm:$0xff]
  %v283 = vld [vmem:[%s1 + $0x778] sm:$0xff]
  %v284 = vld [vmem:[%s1 + $0x780] sm:$0xff]
  %v285 = vld [vmem:[%s1 + $0x788] sm:$0xff]
  %v286 = vld [vmem:[%s1 + $0x790] sm:$0xff]
  %v287 = vld [vmem:[%s1 + $0x798] sm:$0xff]
  %v288 = vld [vmem:[%s1 + $0x7a0] sm:$0xff]
  %v289 = vld [vmem:[%s1 + $0x7a8] sm:$0xff]
  %v290 = vld [vmem:[%s1 + $0x7b0] sm:$0xff]
  %v291 = vld [vmem:[%s1 + $0x7b8] sm:$0xff]
  %v292 = vld [vmem:[%s1 + $0x7c0] sm:$0xff]
  %v293 = vld [vmem:[%s1 + $0x7c8] sm:$0xff]
  %v294 = vld [vmem:[%s1 + $0x7d0] sm:$0xff]
  %v295 = vld [vmem:[%s1 + $0x7d8] sm:$0xff]
  %v296 = vld [vmem:[%s1 + $0x7e0] sm:$0xff]
  %v297 = vld [vmem:[%s1 + $0x7e8] sm:$0xff]
  %v298 = vld [vmem:[%s1 + $0x7f0] sm:$0xff]
  %v299 = vld [vmem:[%s1 + $0x7f8] sm:$0xff]
  %v300 = vld [vmem:[%s1 + $0x800] sm:$0xff]
  %v301 = vld [vmem:[%s1 + $0x808] sm:$0xff]
  %v302 = vld [vmem:[%s1 + $0x810] sm:$0xff]
  %v303 = vld [vmem:[%s1 + $0x818] sm:$0xff]
  %v304 = vld [vmem:[%s1 + $0x820] sm:$0xff]
  %v305 = vld [vmem:[%s1 + $0x828] sm:$0xff]
  %v306 = vld [vmem:[%s1 + $0x830] sm:$0xff]
  %v307 = vld [vmem:[%s1 + $0x838] sm:$0xff]
  %v308 = vld [vmem:[%s1 + $0x840] sm:$0xff]
  %v309 = vld [vmem:[%s1 + $0x848] sm:$0xff]
  %v310 = vld [vmem:[%s1 + $0x850] sm:$0xff]
  %v311 = vld [vmem:[%s1 + $0x858] sm:$0xff]
  %v312 = vld [vmem:[%s1 + $0x860] sm:$0xff]
  %v313 = vld [vmem:[%s1 + $0x868] sm:$0xff]
  %v314 = vld [vmem:[%s1 + $0x870] sm:$0xff]
  %v315 = vld [vmem:[%s1 + $0x878] sm:$0xff]
  %v316 = vld [vmem:[%s1 + $0x880] sm:$0xff]
  %v317 = vld [vmem:[%s1 + $0x888] sm:$0xff]
  %v318 = vld [vmem:[%s1 + $0x890] sm:$0xff]
  %v319 = vld [vmem:[%s1 + $0x898] sm:$0xff]
  %v320 = vld [vmem:[%s1 + $0x8a0] sm:$0xff]
  %v321 = vld [vmem:[%s1 + $0x8a8] sm:$0xff]
  %v322 = vld [vmem:[%s1 + $0x8b0] sm:$0xff]
  %v323 = vld [vmem:[%s1 + $0x8b8] sm:$0xff]
  %v324 = vld [vmem:[%s1 + $0x8c0] sm:$0xff]
  %v325 = vld [vmem:[%s1 + $0x8c8] sm:$0xff]
  %v326 = vld [vmem:[%s1 + $0x8d0] sm:$0xff]
  %v327 = vld [vmem:[%s1 + $0x8d8] sm:$0xff]
  %v328 = vld [vmem:[%s1 + $0x8e0] sm:$0xff]
  %v329 = vld [vmem:[%s1 + $0x8e8] sm:$0xff]
  %v330 = vld [vmem:[%s1 + $0x8f0] sm:$0xff]
  %v331 = vld [vmem:[%s1 + $0x8f8] sm:$0xff]
  %v332 = vld [vmem:[%s1 + $0x900] sm:$0xff]
  %v333 = vld [vmem:[%s1 + $0x908] sm:$0xff]
  %v334 = vld [vmem:[%s1 + $0x910] sm:$0xff]
  %v335 = vld [vmem:[%s1 + $0x918] sm:$0xff]
  %v336 = vld [vmem:[%s1 + $0x920] sm:$0xff]
  %v337 = vld [vmem:[%s1 + $0x928] sm:$0xff]
  %v338 = vld [vmem:[%s1 + $0x930] sm:$0xff]
  %v339 = vld [vmem:[%s1 + $0x938] sm:$0xff]
  %v340 = vld [vmem:[%s1 + $0x940] sm:$0xff]
  %v341 = vld [vmem:[%s1 + $0x948] sm:$0xff]
  %v342 = vld [vmem:[%s1 + $0x950] sm:$0xff]
  %v343 = vld [vmem:[%s1 + $0x958] sm:$0xff]
  %v344 = vld [vmem:[%s1 + $0x960] sm:$0xff]
  %v345 = vld [vmem:[%s1 + $0x968] sm:$0xff]
  %v346 = vld [vmem:[%s1 + $0x970] sm:$0xff]
  %v347 = vld [vmem:[%s1 + $0x978] sm:$0xff]
  %v348 = vld [vmem:[%s1 + $0x980] sm:$0xff]
  %v349 = vld [vmem:[%s1 + $0x988] sm:$0xff]
  %v350 = vld [vmem:[%s1 + $0x990] sm:$0xff]
  %v351 = vld [vmem:[%s1 + $0x998] sm:$0xff]
  %v352 = vld [vmem:[%s1 + $0x9a0] sm:$0xff]
  %v353 = vld [vmem:[%s1 + $0x9a8] sm:$0xff]
  %v354 = vld [vmem:[%s1 + $0x9b0] sm:$0xff]
  %v355 = vld [vmem:[%s1 + $0x9b8] sm:$0xff]
  %v356 = vld [vmem:[%s1 + $0x9c0] sm:$0xff]
  %v357 = vld [vmem:[%s1 + $0x9c8] sm:$0xff]
  %v358 = vld [vmem:[%s1 + $0x9d0] sm:$0xff]
  %v359 = vld [vmem:[%s1 + $0x9d8] sm:$0xff]
  %v360 = vld [vmem:[%s1 + $0x9e0] sm:$0xff]
  %v361 = vld [vmem:[%s1 + $0x9e8] sm:$0xff]
  %v362 = vld [vmem:[%s1 + $0x9f0] sm:$0xff]
  %v363 = vld [vmem:[%s1 + $0x9f8] sm:$0xff]
  %v364 = vld [vmem:[%s1 + $0xa00] sm:$0xff]
  %v365 = vld [vmem:[%s1 + $0xa08] sm:$0xff]
  %v366 = vld [vmem:[%s1 + $0xa10] sm:$0xff]
  %v367 = vld [vmem:[%s1 + $0xa18] sm:$0xff]
  %v368 = vld [vmem:[%s1 + $0xa20] sm:$0xff]
  %v369 = vld [vmem:[%s1 + $0xa28] sm:$0xff]
  %v370 = vld [vmem:[%s1 + $0xa30] sm:$0xff]
  %v371 = vld [vmem:[%s1 + $0xa38] sm:$0xff]
  %v372 = vld [vmem:[%s1 + $0xa40] sm:$0xff]
  %v373 = vld [vmem:[%s1 + $0xa48] sm:$0xff]
  %v374 = vld [vmem:[%s1 + $0xa50] sm:$0xff]
  %v375 = vld [vmem:[%s1 + $0xa58] sm:$0xff]
  %v376 = vld [vmem:[%s1 + $0xa60] sm:$0xff]
  %v377 = vld [vmem:[%s1 + $0xa68] sm:$0xff]
  %v378 = vld [vmem:[%s1 + $0xa70] sm:$0xff]
  %v379 = vld [vmem:[%s1 + $0xa78] sm:$0xff]
  %v380 = vld [vmem:[%s1 + $0xa80] sm:$0xff]
  %v381 = vld [vmem:[%s1 + $0xa88] sm:$0xff]
  %v382 = vld [vmem:[%s1 + $0xa90] sm:$0xff]
  %v383 = vld [vmem:[%s1 + $0xa98] sm:$0xff]
  %v384 = vld [vmem:[%s1 + $0xaa0] sm:$0xff]
  %v385 = vld [vmem:[%s1 + $0xaa8] sm:$0xff]
  %v386 = vld [vmem:[%s1 + $0xab0] sm:$0xff]
  %v387 = vld [vmem:[%s1 + $0xab8] sm:$0xff]
  %v388 = vld [vmem:[%s1 + $0xac0] sm:$0xff]
  %v389 = vld [vmem:[%s1 + $0xac8] sm:$0xff]
  %v390 = vld [vmem:[%s1 + $0xad0] sm:$0xff]
  %v391 = vld [vmem:[%s1 + $0xad8] sm:$0xff]
  %v392 = vld [vmem:[%s1 + $0xae0] sm:$0xff]
  %v393 = vld [vmem:[%s1 + $0xae8] sm:$0xff]
  %v394 = vld [vmem:[%s1 + $0xaf0] sm:$0xff]
  %v395 = vld [vmem:[%s1 + $0xaf8] sm:$0xff]
  %v396 = vld [vmem:[%s1 + $0xb00] sm:$0xff]
  %v397 = vld [vmem:[%s1 + $0xb08] sm:$0xff]
  %v398 = vld [vmem:[%s1 + $0xb10] sm:$0xff]
  %v399 = vld [vmem:[%s1 + $0xb18] sm:$0xff]
  %v400 = vld [vmem:[%s1 + $0xb20] sm:$0xff]
  %v401 = vld [vmem:[%s1 + $0xb28] sm:$0xff]
  %v402 = vld [vmem:[%s1 + $0xb30] sm:$0xff]
  %v403 = vld [vmem:[%s1 + $0xb38] sm:$0xff]
  %v404 = vld [vmem:[%s1 + $0xb40] sm:$0xff]
  %v405 = vld [vmem:[%s1 + $0xb48] sm:$0xff]
  %v406 = vld [vmem:[%s1 + $0xb50] sm:$0xff]
  %v407 = vld [vmem:[%s1 + $0xb58] sm:$0xff]
  %v408 = vld [vmem:[%s1 + $0xb60] sm:$0xff]
  %v409 = vld [vmem:[%s1 + $0xb68] sm:$0xff]
  %v410 = vld [vmem:[%s1 + $0xb70] sm:$0xff]
  %v411 = vld [vmem:[%s1 + $0xb78] sm:$0xff]
  %v412 = vld [vmem:[%s1 + $0xb80] sm:$0xff]
  %v413 = vld [vmem:[%s1 + $0xb88] sm:$0xff]
  %v414 = vld [vmem:[%s1 + $0xb90] sm:$0xff]
  %v415 = vld [vmem:[%s1 + $0xb98] sm:$0xff]
  %v416 = vld [vmem:[%s1 + $0xba0] sm:$0xff]
  %v417 = vld [vmem:[%s1 + $0xba8] sm:$0xff]
  %v418 = vld [vmem:[%s1 + $0xbb0] sm:$0xff]
  %v419 = vld [vmem:[%s1 + $0xbb8] sm:$0xff]
  %v420 = vld [vmem:[%s1 + $0xbc0] sm:$0xff]
  %v421 = vld [vmem:[%s1 + $0xbc8] sm:$0xff]
  %v422 = vld [vmem:[%s1 + $0xbd0] sm:$0xff]
  %v423 = vld [vmem:[%s1 + $0xbd8] sm:$0xff]
  %v424 = vld [vmem:[%s1 + $0xbe0] sm:$0xff]
  %v425 = vld [vmem:[%s1 + $0xbe8] sm:$0xff]
  %v426 = vld [vmem:[%s1 + $0xbf0] sm:$0xff]
  %v427 = vld [vmem:[%s1 + $0xbf8] sm:$0xff]
  %v428 = vld [vmem:[%s5] sm:$0xf]
  %v430 = vlaneseq
  %v431 = vshrl.u32 %v430, 7
  %v432 = vsub.s32 0, %v431
  %v433 = vrot.slane %v428, %v432
  %v434 = vlaneseq
  %v435 = vshrl.u32 %v434, 7
  %v436 = vsub.s32 1, %v435
  %v437 = vrot.slane %v428, %v436
  %v438 = vlaneseq
  %v439 = vshrl.u32 %v438, 7
  %v440 = vsub.s32 2, %v439
  %v441 = vrot.slane %v428, %v440
  %v442 = vlaneseq
  %v443 = vshrl.u32 %v442, 7
  %v444 = vsub.s32 3, %v443
  %v445 = vrot.slane %v428, %v444
  %450 = vmatprep.subr.mxu0 %v45
  %451 = vmatpush1.msra.mxu0 %v44
  %452 = vmatprep.subr.mxu0 %v49
  %453 = vmatpush1.msra.mxu0 %v48
  %454 = vmatprep.subr.mxu0 %v53
  %455 = vmatpush1.msra.mxu0 %v52
  %456 = vmatprep.subr.mxu0 %v57
  %457 = vmatpush1.msra.mxu0 %v56
  %458 = vmatprep.subr.mxu0 %v61
  %459 = vmatpush1.msra.mxu0 %v60
  %460 = vmatprep.subr.mxu0 %v65
  %461 = vmatpush1.msra.mxu0 %v64
  %462 = vmatprep.subr.mxu0 %v69
  %463 = vmatpush1.msra.mxu0 %v68
  %464 = vmatprep.subr.mxu0 %v73
  %465 = vmatpush1.msra.mxu0 %v72
  %466 = vmatprep.subr.mxu0 %v77
  %467 = vmatpush1.msra.mxu0 %v76
  %468 = vmatprep.subr.mxu0 %v81
  %469 = vmatpush1.msra.mxu0 %v80
  %470 = vmatprep.subr.mxu0 %v85
  %471 = vmatpush1.msra.mxu0 %v84
  %472 = vmatprep.subr.mxu0 %v89
  %473 = vmatpush1.msra.mxu0 %v88
  %474 = vmatprep.subr.mxu0 %v93
  %475 = vmatpush1.msra.mxu0 %v92
  %476 = vmatprep.subr.mxu0 %v97
  %477 = vmatpush1.msra.mxu0 %v96
  %478 = vmatprep.subr.mxu0 %v101
  %479 = vmatpush1.msra.mxu0 %v100
  %480 = vmatprep.subr.mxu0 %v105
  %481 = vmatpush1.msra.mxu0 %v104
  %482 = vmatprep.subr.mxu0 %v109
  %483 = vmatpush1.msra.mxu0 %v108
  %484 = vmatprep.subr.mxu0 %v113
  %485 = vmatpush1.msra.mxu0 %v112
  %486 = vmatprep.subr.mxu0 %v117
  %487 = vmatpush1.msra.mxu0 %v116
  %488 = vmatprep.subr.mxu0 %v121
  %489 = vmatpush1.msra.mxu0 %v120
  %490 = vmatprep.subr.mxu0 %v125
  %491 = vmatpush1.msra.mxu0 %v124
  %492 = vmatprep.subr.mxu0 %v129
  %493 = vmatpush1.msra.mxu0 %v128
  %494 = vmatprep.subr.mxu0 %v133
  %495 = vmatpush1.msra.mxu0 %v132
  %496 = vmatprep.subr.mxu0 %v137
  %497 = vmatpush1.msra.mxu0 %v136
  %498 = vmatprep.subr.mxu0 %v141
  %499 = vmatpush1.msra.mxu0 %v140
  %500 = vmatprep.subr.mxu0 %v145
  %501 = vmatpush1.msra.mxu0 %v144
  %502 = vmatprep.subr.mxu0 %v149
  %503 = vmatpush1.msra.mxu0 %v148
  %504 = vmatprep.subr.mxu0 %v153
  %505 = vmatpush1.msra.mxu0 %v152
  %506 = vmatprep.subr.mxu0 %v157
  %507 = vmatpush1.msra.mxu0 %v156
  %508 = vmatprep.subr.mxu0 %v161
  %509 = vmatpush1.msra.mxu0 %v160
  %510 = vmatprep.subr.mxu0 %v165
  %511 = vmatpush1.msra.mxu0 %v164
  %512 = vmatprep.subr.mxu0 %v169
  %513 = vmatpush1.msra.mxu0 %v168
  %514 = vmatprep.mubr.f32.mxu0 %v33
  %515 = vmatmul.mubr.f32.gmra.mrb[0].mxu0 %v32
  %v516 = vpop.f32.mrb[0].mxu0
  %v517 = vadd.f32 %v433, %v516
  %v518 = vpop.f32.mrb[0].mxu0
  %v519 = vadd.f32 %v437, %v518
  %520 = vmatprep.mubr.f32.mxu0 %v39
  %521 = vmatmul.mubr.f32.gmra.mrb[0].mxu0 %v38
  %v522 = vpop.f32.mrb[0].mxu0
  %v523 = vadd.f32 %v433, %v522
  %v524 = vpop.f32.mrb[0].mxu0
  %v525 = vadd.f32 %v437, %v524
  %526 = vdwg.mxu0
  %527 = vmatprep.subr.mxu0 %v173
  %528 = vmatpush1.msra.mxu0 %v172
  %529 = vmatprep.subr.mxu0 %v177
  %530 = vmatpush1.msra.mxu0 %v176
  %531 = vmatprep.subr.mxu0 %v181
  %532 = vmatpush1.msra.mxu0 %v180
  %533 = vmatprep.subr.mxu0 %v185
  %534 = vmatpush1.msra.mxu0 %v184
  %535 = vmatprep.subr.mxu0 %v189
  %536 = vmatpush1.msra.mxu0 %v188
  %537 = vmatprep.subr.mxu0 %v193
  %538 = vmatpush1.msra.mxu0 %v192
  %539 = vmatprep.subr.mxu0 %v197
  %540 = vmatpush1.msra.mxu0 %v196
  %541 = vmatprep.subr.mxu0 %v201
  %542 = vmatpush1.msra.mxu0 %v200
  %543 = vmatprep.subr.mxu0 %v205
  %544 = vmatpush1.msra.mxu0 %v204
  %545 = vmatprep.subr.mxu0 %v209
  %546 = vmatpush1.msra.mxu0 %v208
  %547 = vmatprep.subr.mxu0 %v213
  %548 = vmatpush1.msra.mxu0 %v212
  %549 = vmatprep.subr.mxu0 %v217
  %550 = vmatpush1.msra.mxu0 %v216
  %551 = vmatprep.subr.mxu0 %v221
  %552 = vmatpush1.msra.mxu0 %v220
  %553 = vmatprep.subr.mxu0 %v225
  %554 = vmatpush1.msra.mxu0 %v224
  %555 = vmatprep.subr.mxu0 %v229
  %556 = vmatpush1.msra.mxu0 %v228
  %557 = vmatprep.subr.mxu0 %v233
  %558 = vmatpush1.msra.mxu0 %v232
  %559 = vmatprep.subr.mxu0 %v237
  %560 = vmatpush1.msra.mxu0 %v236
  %561 = vmatprep.subr.mxu0 %v241
  %562 = vmatpush1.msra.mxu0 %v240
  %563 = vmatprep.subr.mxu0 %v245
  %564 = vmatpush1.msra.mxu0 %v244
  %565 = vmatprep.subr.mxu0 %v249
  %566 = vmatpush1.msra.mxu0 %v248
  %567 = vmatprep.subr.mxu0 %v253
  %568 = vmatpush1.msra.mxu0 %v252
  %569 = vmatprep.subr.mxu0 %v257
  %570 = vmatpush1.msra.mxu0 %v256
  %571 = vmatprep.subr.mxu0 %v261
  %572 = vmatpush1.msra.mxu0 %v260
  %573 = vmatprep.subr.mxu0 %v265
  %574 = vmatpush1.msra.mxu0 %v264
  %575 = vmatprep.subr.mxu0 %v269
  %576 = vmatpush1.msra.mxu0 %v268
  %577 = vmatprep.subr.mxu0 %v273
  %578 = vmatpush1.msra.mxu0 %v272
  %579 = vmatprep.subr.mxu0 %v277
  %580 = vmatpush1.msra.mxu0 %v276
  %581 = vmatprep.subr.mxu0 %v281
  %582 = vmatpush1.msra.mxu0 %v280
  %583 = vmatprep.subr.mxu0 %v285
  %584 = vmatpush1.msra.mxu0 %v284
  %585 = vmatprep.subr.mxu0 %v289
  %586 = vmatpush1.msra.mxu0 %v288
  %587 = vmatprep.subr.mxu0 %v293
  %588 = vmatpush1.msra.mxu0 %v292
  %589 = vmatprep.subr.mxu0 %v297
  %590 = vmatpush1.msra.mxu0 %v296
  %591 = vmatprep.mubr.f32.mxu0 %v35
  %592 = vmatmul.mubr.f32.gmra.mrb[0].mxu0 %v34
  %v593 = vpop.f32.mrb[0].mxu0
  %v594 = vadd.f32 %v517, %v593
  %v595 = vpop.f32.mrb[0].mxu0
  %v596 = vadd.f32 %v519, %v595
  %597 = vmatprep.mubr.f32.mxu0 %v41
  %598 = vmatmul.mubr.f32.gmra.mrb[0].mxu0 %v40
  %v599 = vpop.f32.mrb[0].mxu0
  %v600 = vadd.f32 %v523, %v599
  %v601 = vpop.f32.mrb[0].mxu0
  %v602 = vadd.f32 %v525, %v601
  %603 = vdwg.mxu0
  %604 = vmatprep.subr.mxu0 %v301
  %605 = vmatpush1.msra.mxu0 %v300
  %606 = vmatprep.subr.mxu0 %v305
  %607 = vmatpush1.msra.mxu0 %v304
  %608 = vmatprep.subr.mxu0 %v309
  %609 = vmatpush1.msra.mxu0 %v308
  %610 = vmatprep.subr.mxu0 %v313
  %611 = vmatpush1.msra.mxu0 %v312
  %612 = vmatprep.subr.mxu0 %v317
  %613 = vmatpush1.msra.mxu0 %v316
  %614 = vmatprep.subr.mxu0 %v321
  %615 = vmatpush1.msra.mxu0 %v320
  %616 = vmatprep.subr.mxu0 %v325
  %617 = vmatpush1.msra.mxu0 %v324
  %618 = vmatprep.subr.mxu0 %v329
  %619 = vmatpush1.msra.mxu0 %v328
  %620 = vmatprep.subr.mxu0 %v333
  %621 = vmatpush1.msra.mxu0 %v332
  %622 = vmatprep.subr.mxu0 %v337
  %623 = vmatpush1.msra.mxu0 %v336
  %624 = vmatprep.subr.mxu0 %v341
  %625 = vmatpush1.msra.mxu0 %v340
  %626 = vmatprep.subr.mxu0 %v345
  %627 = vmatpush1.msra.mxu0 %v344
  %628 = vmatprep.subr.mxu0 %v349
  %629 = vmatpush1.msra.mxu0 %v348
  %630 = vmatprep.subr.mxu0 %v353
  %631 = vmatpush1.msra.mxu0 %v352
  %632 = vmatprep.subr.mxu0 %v357
  %633 = vmatpush1.msra.mxu0 %v356
  %634 = vmatprep.subr.mxu0 %v361
  %635 = vmatpush1.msra.mxu0 %v360
  %636 = vmatprep.subr.mxu0 %v365
  %637 = vmatpush1.msra.mxu0 %v364
  %638 = vmatprep.subr.mxu0 %v369
  %639 = vmatpush1.msra.mxu0 %v368
  %640 = vmatprep.subr.mxu0 %v373
  %641 = vmatpush1.msra.mxu0 %v372
  %642 = vmatprep.subr.mxu0 %v377
  %643 = vmatpush1.msra.mxu0 %v376
  %644 = vmatprep.subr.mxu0 %v381
  %645 = vmatpush1.msra.mxu0 %v380
  %646 = vmatprep.subr.mxu0 %v385
  %647 = vmatpush1.msra.mxu0 %v384
  %648 = vmatprep.subr.mxu0 %v389
  %649 = vmatpush1.msra.mxu0 %v388
  %650 = vmatprep.subr.mxu0 %v393
  %651 = vmatpush1.msra.mxu0 %v392
  %652 = vmatprep.subr.mxu0 %v397
  %653 = vmatpush1.msra.mxu0 %v396
  %654 = vmatprep.subr.mxu0 %v401
  %655 = vmatpush1.msra.mxu0 %v400
  %656 = vmatprep.subr.mxu0 %v405
  %657 = vmatpush1.msra.mxu0 %v404
  %658 = vmatprep.subr.mxu0 %v409
  %659 = vmatpush1.msra.mxu0 %v408
  %660 = vmatprep.subr.mxu0 %v413
  %661 = vmatpush1.msra.mxu0 %v412
  %662 = vmatprep.subr.mxu0 %v417
  %663 = vmatpush1.msra.mxu0 %v416
  %664 = vmatprep.subr.mxu0 %v421
  %665 = vmatpush1.msra.mxu0 %v420
  %666 = vmatprep.subr.mxu0 %v425
  %667 = vmatpush1.msra.mxu0 %v424
  %668 = vmatprep.mubr.f32.mxu0 %v37
  %669 = vmatmul.mubr.f32.gmra.mrb[0].mxu0 %v36
  %v670 = vpop.f32.mrb[0].mxu0
  %v671 = vadd.f32 %v594, %v670
  %v672 = vpop.f32.mrb[0].mxu0
  %v673 = vadd.f32 %v596, %v672
  %674 = vmatprep.mubr.f32.mxu0 %v43
  %675 = vmatmul.mubr.f32.gmra.mrb[0].mxu0 %v42
  %v676 = vpop.f32.mrb[0].mxu0
  %v677 = vadd.f32 %v600, %v676
  %v678 = vpop.f32.mrb[0].mxu0
  %v679 = vadd.f32 %v602, %v678
  %680 = vdwg.mxu0
  %681 = vmatprep.subr.mxu0 %v47
  %682 = vmatpush1.msra.mxu0 %v46
  %683 = vmatprep.subr.mxu0 %v51
  %684 = vmatpush1.msra.mxu0 %v50
  %685 = vmatprep.subr.mxu0 %v55
  %686 = vmatpush1.msra.mxu0 %v54
  %687 = vmatprep.subr.mxu0 %v59
  %688 = vmatpush1.msra.mxu0 %v58
  %689 = vmatprep.subr.mxu0 %v63
  %690 = vmatpush1.msra.mxu0 %v62
  %691 = vmatprep.subr.mxu0 %v67
  %692 = vmatpush1.msra.mxu0 %v66
  %693 = vmatprep.subr.mxu0 %v71
  %694 = vmatpush1.msra.mxu0 %v70
  %695 = vmatprep.subr.mxu0 %v75
  %696 = vmatpush1.msra.mxu0 %v74
  %697 = vmatprep.subr.mxu0 %v79
  %698 = vmatpush1.msra.mxu0 %v78
  %699 = vmatprep.subr.mxu0 %v83
  %700 = vmatpush1.msra.mxu0 %v82
  %701 = vmatprep.subr.mxu0 %v87
  %702 = vmatpush1.msra.mxu0 %v86
  %703 = vmatprep.subr.mxu0 %v91
  %704 = vmatpush1.msra.mxu0 %v90
  %705 = vmatprep.subr.mxu0 %v95
  %706 = vmatpush1.msra.mxu0 %v94
  %707 = vmatprep.subr.mxu0 %v99
  %708 = vmatpush1.msra.mxu0 %v98
  %709 = vmatprep.subr.mxu0 %v103
  %710 = vmatpush1.msra.mxu0 %v102
  %711 = vmatprep.subr.mxu0 %v107
  %712 = vmatpush1.msra.mxu0 %v106
  %713 = vmatprep.subr.mxu0 %v111
  %714 = vmatpush1.msra.mxu0 %v110
  %715 = vmatprep.subr.mxu0 %v115
  %716 = vmatpush1.msra.mxu0 %v114
  %717 = vmatprep.subr.mxu0 %v119
  %718 = vmatpush1.msra.mxu0 %v118
  %719 = vmatprep.subr.mxu0 %v123
  %720 = vmatpush1.msra.mxu0 %v122
  %721 = vmatprep.subr.mxu0 %v127
  %722 = vmatpush1.msra.mxu0 %v126
  %723 = vmatprep.subr.mxu0 %v131
  %724 = vmatpush1.msra.mxu0 %v130
  %725 = vmatprep.subr.mxu0 %v135
  %726 = vmatpush1.msra.mxu0 %v134
  %727 = vmatprep.subr.mxu0 %v139
  %728 = vmatpush1.msra.mxu0 %v138
  %729 = vmatprep.subr.mxu0 %v143
  %730 = vmatpush1.msra.mxu0 %v142
  %731 = vmatprep.subr.mxu0 %v147
  %732 = vmatpush1.msra.mxu0 %v146
  %733 = vmatprep.subr.mxu0 %v151
  %734 = vmatpush1.msra.mxu0 %v150
  %735 = vmatprep.subr.mxu0 %v155
  %736 = vmatpush1.msra.mxu0 %v154
  %737 = vmatprep.subr.mxu0 %v159
  %738 = vmatpush1.msra.mxu0 %v158
  %739 = vmatprep.subr.mxu0 %v163
  %740 = vmatpush1.msra.mxu0 %v162
  %741 = vmatprep.subr.mxu0 %v167
  %742 = vmatpush1.msra.mxu0 %v166
  %743 = vmatprep.subr.mxu0 %v171
  %744 = vmatpush1.msra.mxu0 %v170
  %745 = vmatprep.mubr.f32.mxu0 %v33
  %746 = vmatmul.mubr.f32.gmra.mrb[0].mxu0 %v32
  %v747 = vpop.f32.mrb[0].mxu0
  %v748 = vadd.f32 %v441, %v747
  %v749 = vpop.f32.mrb[0].mxu0
  %v750 = vadd.f32 %v445, %v749
  %751 = vmatprep.mubr.f32.mxu0 %v39
  %752 = vmatmul.mubr.f32.gmra.mrb[0].mxu0 %v38
  %v753 = vpop.f32.mrb[0].mxu0
  %v754 = vadd.f32 %v441, %v753
  %v755 = vpop.f32.mrb[0].mxu0
  %v756 = vadd.f32 %v445, %v755
  %757 = vdwg.mxu0
  %758 = vmatprep.subr.mxu0 %v175
  %759 = vmatpush1.msra.mxu0 %v174
  %760 = vmatprep.subr.mxu0 %v179
  %761 = vmatpush1.msra.mxu0 %v178
  %762 = vmatprep.subr.mxu0 %v183
  %763 = vmatpush1.msra.mxu0 %v182
  %764 = vmatprep.subr.mxu0 %v187
  %765 = vmatpush1.msra.mxu0 %v186
  %766 = vmatprep.subr.mxu0 %v191
  %767 = vmatpush1.msra.mxu0 %v190
  %768 = vmatprep.subr.mxu0 %v195
  %769 = vmatpush1.msra.mxu0 %v194
  %770 = vmatprep.subr.mxu0 %v199
  %771 = vmatpush1.msra.mxu0 %v198
  %772 = vmatprep.subr.mxu0 %v203
  %773 = vmatpush1.msra.mxu0 %v202
  %774 = vmatprep.subr.mxu0 %v207
  %775 = vmatpush1.msra.mxu0 %v206
  %776 = vmatprep.subr.mxu0 %v211
  %777 = vmatpush1.msra.mxu0 %v210
  %778 = vmatprep.subr.mxu0 %v215
  %779 = vmatpush1.msra.mxu0 %v214
  %780 = vmatprep.subr.mxu0 %v219
  %781 = vmatpush1.msra.mxu0 %v218
  %782 = vmatprep.subr.mxu0 %v223
  %783 = vmatpush1.msra.mxu0 %v222
  %784 = vmatprep.subr.mxu0 %v227
  %785 = vmatpush1.msra.mxu0 %v226
  %786 = vmatprep.subr.mxu0 %v231
  %787 = vmatpush1.msra.mxu0 %v230
  %788 = vmatprep.subr.mxu0 %v235
  %789 = vmatpush1.msra.mxu0 %v234
  %790 = vmatprep.subr.mxu0 %v239
  %791 = vmatpush1.msra.mxu0 %v238
  %792 = vmatprep.subr.mxu0 %v243
  %793 = vmatpush1.msra.mxu0 %v242
  %794 = vmatprep.subr.mxu0 %v247
  %795 = vmatpush1.msra.mxu0 %v246
  %796 = vmatprep.subr.mxu0 %v251
  %797 = vmatpush1.msra.mxu0 %v250
  %798 = vmatprep.subr.mxu0 %v255
  %799 = vmatpush1.msra.mxu0 %v254
  %800 = vmatprep.subr.mxu0 %v259
  %801 = vmatpush1.msra.mxu0 %v258
  %802 = vmatprep.subr.mxu0 %v263
  %803 = vmatpush1.msra.mxu0 %v262
  %804 = vmatprep.subr.mxu0 %v267
  %805 = vmatpush1.msra.mxu0 %v266
  %806 = vmatprep.subr.mxu0 %v271
  %807 = vmatpush1.msra.mxu0 %v270
  %808 = vmatprep.subr.mxu0 %v275
  %809 = vmatpush1.msra.mxu0 %v274
  %810 = vmatprep.subr.mxu0 %v279
  %811 = vmatpush1.msra.mxu0 %v278
  %812 = vmatprep.subr.mxu0 %v283
  %813 = vmatpush1.msra.mxu0 %v282
  %814 = vmatprep.subr.mxu0 %v287
  %815 = vmatpush1.msra.mxu0 %v286
  %816 = vmatprep.subr.mxu0 %v291
  %817 = vmatpush1.msra.mxu0 %v290
  %818 = vmatprep.subr.mxu0 %v295
  %819 = vmatpush1.msra.mxu0 %v294
  %820 = vmatprep.subr.mxu0 %v299
  %821 = vmatpush1.msra.mxu0 %v298
  %822 = vmatprep.mubr.f32.mxu0 %v35
  %823 = vmatmul.mubr.f32.gmra.mrb[0].mxu0 %v34
  %v824 = vpop.f32.mrb[0].mxu0
  %v825 = vadd.f32 %v748, %v824
  %v826 = vpop.f32.mrb[0].mxu0
  %v827 = vadd.f32 %v750, %v826
  %828 = vmatprep.mubr.f32.mxu0 %v41
  %829 = vmatmul.mubr.f32.gmra.mrb[0].mxu0 %v40
  %v830 = vpop.f32.mrb[0].mxu0
  %v831 = vadd.f32 %v754, %v830
  %v832 = vpop.f32.mrb[0].mxu0
  %v833 = vadd.f32 %v756, %v832
  %834 = vdwg.mxu0
  %835 = vmatprep.subr.mxu0 %v303
  %836 = vmatpush1.msra.mxu0 %v302
  %837 = vmatprep.subr.mxu0 %v307
  %838 = vmatpush1.msra.mxu0 %v306
  %839 = vmatprep.subr.mxu0 %v311
  %840 = vmatpush1.msra.mxu0 %v310
  %841 = vmatprep.subr.mxu0 %v315
  %842 = vmatpush1.msra.mxu0 %v314
  %843 = vmatprep.subr.mxu0 %v319
  %844 = vmatpush1.msra.mxu0 %v318
  %845 = vmatprep.subr.mxu0 %v323
  %846 = vmatpush1.msra.mxu0 %v322
  %847 = vmatprep.subr.mxu0 %v327
  %848 = vmatpush1.msra.mxu0 %v326
  %849 = vmatprep.subr.mxu0 %v331
  %850 = vmatpush1.msra.mxu0 %v330
  %851 = vmatprep.subr.mxu0 %v335
  %852 = vmatpush1.msra.mxu0 %v334
  %853 = vmatprep.subr.mxu0 %v339
  %854 = vmatpush1.msra.mxu0 %v338
  %855 = vmatprep.subr.mxu0 %v343
  %856 = vmatpush1.msra.mxu0 %v342
  %857 = vmatprep.subr.mxu0 %v347
  %858 = vmatpush1.msra.mxu0 %v346
  %859 = vmatprep.subr.mxu0 %v351
  %860 = vmatpush1.msra.mxu0 %v350
  %861 = vmatprep.subr.mxu0 %v355
  %862 = vmatpush1.msra.mxu0 %v354
  %863 = vmatprep.subr.mxu0 %v359
  %864 = vmatpush1.msra.mxu0 %v358
  %865 = vmatprep.subr.mxu0 %v363
  %866 = vmatpush1.msra.mxu0 %v362
  %867 = vmatprep.subr.mxu0 %v367
  %868 = vmatpush1.msra.mxu0 %v366
  %869 = vmatprep.subr.mxu0 %v371
  %870 = vmatpush1.msra.mxu0 %v370
  %871 = vmatprep.subr.mxu0 %v375
  %872 = vmatpush1.msra.mxu0 %v374
  %873 = vmatprep.subr.mxu0 %v379
  %874 = vmatpush1.msra.mxu0 %v378
  %875 = vmatprep.subr.mxu0 %v383
  %876 = vmatpush1.msra.mxu0 %v382
  %877 = vmatprep.subr.mxu0 %v387
  %878 = vmatpush1.msra.mxu0 %v386
  %879 = vmatprep.subr.mxu0 %v391
  %880 = vmatpush1.msra.mxu0 %v390
  %881 = vmatprep.subr.mxu0 %v395
  %882 = vmatpush1.msra.mxu0 %v394
  %883 = vmatprep.subr.mxu0 %v399
  %884 = vmatpush1.msra.mxu0 %v398
  %885 = vmatprep.subr.mxu0 %v403
  %886 = vmatpush1.msra.mxu0 %v402
  %887 = vmatprep.subr.mxu0 %v407
  %888 = vmatpush1.msra.mxu0 %v406
  %889 = vmatprep.subr.mxu0 %v411
  %890 = vmatpush1.msra.mxu0 %v410
  %891 = vmatprep.subr.mxu0 %v415
  %892 = vmatpush1.msra.mxu0 %v414
  %893 = vmatprep.subr.mxu0 %v419
  %894 = vmatpush1.msra.mxu0 %v418
  %895 = vmatprep.subr.mxu0 %v423
  %896 = vmatpush1.msra.mxu0 %v422
  %897 = vmatprep.subr.mxu0 %v427
  %898 = vmatpush1.msra.mxu0 %v426
  %899 = vmatprep.mubr.f32.mxu0 %v37
  %900 = vmatmul.mubr.f32.gmra.mrb[0].mxu0 %v36
  %v901 = vpop.f32.mrb[0].mxu0
  %v902 = vadd.f32 %v825, %v901
  %v903 = vpop.f32.mrb[0].mxu0
  %v904 = vadd.f32 %v827, %v903
  %905 = vmatprep.mubr.f32.mxu0 %v43
  %906 = vmatmul.mubr.f32.gmra.mrb[0].mxu0 %v42
  %v907 = vpop.f32.mrb[0].mxu0
  %v908 = vadd.f32 %v831, %v907
  %v909 = vpop.f32.mrb[0].mxu0
  %v910 = vadd.f32 %v833, %v909
  %911 = vdwg.mxu0
  %v912 = vmax.f32 %v671, 0.0
  %v913 = vmax.f32 %v673, 0.0
  %v914 = vmax.f32 %v902, 0.0
  %v915 = vmax.f32 %v904, 0.0
  %v916 = vmax.f32 %v677, 0.0
  %v917 = vmax.f32 %v679, 0.0
  %v918 = vmax.f32 %v908, 0.0
  %v919 = vmax.f32 %v910, 0.0
  %v920 = vld [vmem:[%s2] sm:$0xff]
  %v921 = vld [vmem:[%s2 + $0x8] sm:$0xff]
  %v922 = vld [vmem:[%s2 + $0x10] sm:$0xff]
  %v923 = vld [vmem:[%s2 + $0x18] sm:$0xff]
  %v924 = vld [vmem:[%s2 + $0x20] sm:$0xff]
  %v925 = vld [vmem:[%s2 + $0x28] sm:$0xff]
  %v926 = vld [vmem:[%s2 + $0x30] sm:$0xff]
  %v927 = vld [vmem:[%s2 + $0x38] sm:$0xff]
  %v928 = vld [vmem:[%s2 + $0x40] sm:$0xff]
  %v929 = vld [vmem:[%s2 + $0x48] sm:$0xff]
  %v930 = vld [vmem:[%s2 + $0x50] sm:$0xff]
  %v931 = vld [vmem:[%s2 + $0x58] sm:$0xff]
  %v932 = vld [vmem:[%s2 + $0x60] sm:$0xff]
  %v933 = vld [vmem:[%s2 + $0x68] sm:$0xff]
  %v934 = vld [vmem:[%s2 + $0x70] sm:$0xff]
  %v935 = vld [vmem:[%s2 + $0x78] sm:$0xff]
  %v936 = vld [vmem:[%s2 + $0x80] sm:$0xff]
  %v937 = vld [vmem:[%s2 + $0x88] sm:$0xff]
  %v938 = vld [vmem:[%s2 + $0x90] sm:$0xff]
  %v939 = vld [vmem:[%s2 + $0x98] sm:$0xff]
  %v940 = vld [vmem:[%s2 + $0xa0] sm:$0xff]
  %v941 = vld [vmem:[%s2 + $0xa8] sm:$0xff]
  %v942 = vld [vmem:[%s2 + $0xb0] sm:$0xff]
  %v943 = vld [vmem:[%s2 + $0xb8] sm:$0xff]
  %v944 = vld [vmem:[%s2 + $0xc0] sm:$0xff]
  %v945 = vld [vmem:[%s2 + $0xc8] sm:$0xff]
  %v946 = vld [vmem:[%s2 + $0xd0] sm:$0xff]
  %v947 = vld [vmem:[%s2 + $0xd8] sm:$0xff]
  %v948 = vld [vmem:[%s2 + $0xe0] sm:$0xff]
  %v949 = vld [vmem:[%s2 + $0xe8] sm:$0xff]
  %v950 = vld [vmem:[%s2 + $0xf0] sm:$0xff]
  %v951 = vld [vmem:[%s2 + $0xf8] sm:$0xff]
  %v952 = vld [vmem:[%s2 + $0x100] sm:$0xff]
  %v953 = vld [vmem:[%s2 + $0x108] sm:$0xff]
  %v954 = vld [vmem:[%s2 + $0x110] sm:$0xff]
  %v955 = vld [vmem:[%s2 + $0x118] sm:$0xff]
  %v956 = vld [vmem:[%s2 + $0x120] sm:$0xff]
  %v957 = vld [vmem:[%s2 + $0x128] sm:$0xff]
  %v958 = vld [vmem:[%s2 + $0x130] sm:$0xff]
  %v959 = vld [vmem:[%s2 + $0x138] sm:$0xff]
  %v960 = vld [vmem:[%s2 + $0x140] sm:$0xff]
  %v961 = vld [vmem:[%s2 + $0x148] sm:$0xff]
  %v962 = vld [vmem:[%s2 + $0x150] sm:$0xff]
  %v963 = vld [vmem:[%s2 + $0x158] sm:$0xff]
  %v964 = vld [vmem:[%s2 + $0x160] sm:$0xff]
  %v965 = vld [vmem:[%s2 + $0x168] sm:$0xff]
  %v966 = vld [vmem:[%s2 + $0x170] sm:$0xff]
  %v967 = vld [vmem:[%s2 + $0x178] sm:$0xff]
  %v968 = vld [vmem:[%s2 + $0x180] sm:$0xff]
  %v969 = vld [vmem:[%s2 + $0x188] sm:$0xff]
  %v970 = vld [vmem:[%s2 + $0x190] sm:$0xff]
  %v971 = vld [vmem:[%s2 + $0x198] sm:$0xff]
  %v972 = vld [vmem:[%s2 + $0x1a0] sm:$0xff]
  %v973 = vld [vmem:[%s2 + $0x1a8] sm:$0xff]
  %v974 = vld [vmem:[%s2 + $0x1b0] sm:$0xff]
  %v975 = vld [vmem:[%s2 + $0x1b8] sm:$0xff]
  %v976 = vld [vmem:[%s2 + $0x1c0] sm:$0xff]
  %v977 = vld [vmem:[%s2 + $0x1c8] sm:$0xff]
  %v978 = vld [vmem:[%s2 + $0x1d0] sm:$0xff]
  %v979 = vld [vmem:[%s2 + $0x1d8] sm:$0xff]
  %v980 = vld [vmem:[%s2 + $0x1e0] sm:$0xff]
  %v981 = vld [vmem:[%s2 + $0x1e8] sm:$0xff]
  %v982 = vld [vmem:[%s2 + $0x1f0] sm:$0xff]
  %v983 = vld [vmem:[%s2 + $0x1f8] sm:$0xff]
  %v984 = vld [vmem:[%s2 + $0x200] sm:$0xff]
  %v985 = vld [vmem:[%s2 + $0x208] sm:$0xff]
  %v986 = vld [vmem:[%s2 + $0x210] sm:$0xff]
  %v987 = vld [vmem:[%s2 + $0x218] sm:$0xff]
  %v988 = vld [vmem:[%s2 + $0x220] sm:$0xff]
  %v989 = vld [vmem:[%s2 + $0x228] sm:$0xff]
  %v990 = vld [vmem:[%s2 + $0x230] sm:$0xff]
  %v991 = vld [vmem:[%s2 + $0x238] sm:$0xff]
  %v992 = vld [vmem:[%s2 + $0x240] sm:$0xff]
  %v993 = vld [vmem:[%s2 + $0x248] sm:$0xff]
  %v994 = vld [vmem:[%s2 + $0x250] sm:$0xff]
  %v995 = vld [vmem:[%s2 + $0x258] sm:$0xff]
  %v996 = vld [vmem:[%s2 + $0x260] sm:$0xff]
  %v997 = vld [vmem:[%s2 + $0x268] sm:$0xff]
  %v998 = vld [vmem:[%s2 + $0x270] sm:$0xff]
  %v999 = vld [vmem:[%s2 + $0x278] sm:$0xff]
  %v1000 = vld [vmem:[%s2 + $0x280] sm:$0xff]
  %v1001 = vld [vmem:[%s2 + $0x288] sm:$0xff]
  %v1002 = vld [vmem:[%s2 + $0x290] sm:$0xff]
  %v1003 = vld [vmem:[%s2 + $0x298] sm:$0xff]
  %v1004 = vld [vmem:[%s2 + $0x2a0] sm:$0xff]
  %v1005 = vld [vmem:[%s2 + $0x2a8] sm:$0xff]
  %v1006 = vld [vmem:[%s2 + $0x2b0] sm:$0xff]
  %v1007 = vld [vmem:[%s2 + $0x2b8] sm:$0xff]
  %v1008 = vld [vmem:[%s2 + $0x2c0] sm:$0xff]
  %v1009 = vld [vmem:[%s2 + $0x2c8] sm:$0xff]
  %v1010 = vld [vmem:[%s2 + $0x2d0] sm:$0xff]
  %v1011 = vld [vmem:[%s2 + $0x2d8] sm:$0xff]
  %v1012 = vld [vmem:[%s2 + $0x2e0] sm:$0xff]
  %v1013 = vld [vmem:[%s2 + $0x2e8] sm:$0xff]
  %v1014 = vld [vmem:[%s2 + $0x2f0] sm:$0xff]
  %v1015 = vld [vmem:[%s2 + $0x2f8] sm:$0xff]
  %v1016 = vld [vmem:[%s2 + $0x300] sm:$0xff]
  %v1017 = vld [vmem:[%s2 + $0x308] sm:$0xff]
  %v1018 = vld [vmem:[%s2 + $0x310] sm:$0xff]
  %v1019 = vld [vmem:[%s2 + $0x318] sm:$0xff]
  %v1020 = vld [vmem:[%s2 + $0x320] sm:$0xff]
  %v1021 = vld [vmem:[%s2 + $0x328] sm:$0xff]
  %v1022 = vld [vmem:[%s2 + $0x330] sm:$0xff]
  %v1023 = vld [vmem:[%s2 + $0x338] sm:$0xff]
  %v1024 = vld [vmem:[%s2 + $0x340] sm:$0xff]
  %v1025 = vld [vmem:[%s2 + $0x348] sm:$0xff]
  %v1026 = vld [vmem:[%s2 + $0x350] sm:$0xff]
  %v1027 = vld [vmem:[%s2 + $0x358] sm:$0xff]
  %v1028 = vld [vmem:[%s2 + $0x360] sm:$0xff]
  %v1029 = vld [vmem:[%s2 + $0x368] sm:$0xff]
  %v1030 = vld [vmem:[%s2 + $0x370] sm:$0xff]
  %v1031 = vld [vmem:[%s2 + $0x378] sm:$0xff]
  %v1032 = vld [vmem:[%s2 + $0x380] sm:$0xff]
  %v1033 = vld [vmem:[%s2 + $0x388] sm:$0xff]
  %v1034 = vld [vmem:[%s2 + $0x390] sm:$0xff]
  %v1035 = vld [vmem:[%s2 + $0x398] sm:$0xff]
  %v1036 = vld [vmem:[%s2 + $0x3a0] sm:$0xff]
  %v1037 = vld [vmem:[%s2 + $0x3a8] sm:$0xff]
  %v1038 = vld [vmem:[%s2 + $0x3b0] sm:$0xff]
  %v1039 = vld [vmem:[%s2 + $0x3b8] sm:$0xff]
  %v1040 = vld [vmem:[%s2 + $0x3c0] sm:$0xff]
  %v1041 = vld [vmem:[%s2 + $0x3c8] sm:$0xff]
  %v1042 = vld [vmem:[%s2 + $0x3d0] sm:$0xff]
  %v1043 = vld [vmem:[%s2 + $0x3d8] sm:$0xff]
  %v1044 = vld [vmem:[%s2 + $0x3e0] sm:$0xff]
  %v1045 = vld [vmem:[%s2 + $0x3e8] sm:$0xff]
  %v1046 = vld [vmem:[%s2 + $0x3f0] sm:$0xff]
  %v1047 = vld [vmem:[%s2 + $0x3f8] sm:$0xff]
  %v1048 = vld [vmem:[%s2 + $0x400] sm:$0xff]
  %v1049 = vld [vmem:[%s2 + $0x408] sm:$0xff]
  %v1050 = vld [vmem:[%s2 + $0x410] sm:$0xff]
  %v1051 = vld [vmem:[%s2 + $0x418] sm:$0xff]
  %v1052 = vld [vmem:[%s2 + $0x420] sm:$0xff]
  %v1053 = vld [vmem:[%s2 + $0x428] sm:$0xff]
  %v1054 = vld [vmem:[%s2 + $0x430] sm:$0xff]
  %v1055 = vld [vmem:[%s2 + $0x438] sm:$0xff]
  %v1056 = vld [vmem:[%s2 + $0x440] sm:$0xff]
  %v1057 = vld [vmem:[%s2 + $0x448] sm:$0xff]
  %v1058 = vld [vmem:[%s2 + $0x450] sm:$0xff]
  %v1059 = vld [vmem:[%s2 + $0x458] sm:$0xff]
  %v1060 = vld [vmem:[%s2 + $0x460] sm:$0xff]
  %v1061 = vld [vmem:[%s2 + $0x468] sm:$0xff]
  %v1062 = vld [vmem:[%s2 + $0x470] sm:$0xff]
  %v1063 = vld [vmem:[%s2 + $0x478] sm:$0xff]
  %v1064 = vld [vmem:[%s2 + $0x480] sm:$0xff]
  %v1065 = vld [vmem:[%s2 + $0x488] sm:$0xff]
  %v1066 = vld [vmem:[%s2 + $0x490] sm:$0xff]
  %v1067 = vld [vmem:[%s2 + $0x498] sm:$0xff]
  %v1068 = vld [vmem:[%s2 + $0x4a0] sm:$0xff]
  %v1069 = vld [vmem:[%s2 + $0x4a8] sm:$0xff]
  %v1070 = vld [vmem:[%s2 + $0x4b0] sm:$0xff]
  %v1071 = vld [vmem:[%s2 + $0x4b8] sm:$0xff]
  %v1072 = vld [vmem:[%s2 + $0x4c0] sm:$0xff]
  %v1073 = vld [vmem:[%s2 + $0x4c8] sm:$0xff]
  %v1074 = vld [vmem:[%s2 + $0x4d0] sm:$0xff]
  %v1075 = vld [vmem:[%s2 + $0x4d8] sm:$0xff]
  %v1076 = vld [vmem:[%s2 + $0x4e0] sm:$0xff]
  %v1077 = vld [vmem:[%s2 + $0x4e8] sm:$0xff]
  %v1078 = vld [vmem:[%s2 + $0x4f0] sm:$0xff]
  %v1079 = vld [vmem:[%s2 + $0x4f8] sm:$0xff]
  %v1080 = vld [vmem:[%s2 + $0x500] sm:$0xff]
  %v1081 = vld [vmem:[%s2 + $0x508] sm:$0xff]
  %v1082 = vld [vmem:[%s2 + $0x510] sm:$0xff]
  %v1083 = vld [vmem:[%s2 + $0x518] sm:$0xff]
  %v1084 = vld [vmem:[%s2 + $0x520] sm:$0xff]
  %v1085 = vld [vmem:[%s2 + $0x528] sm:$0xff]
  %v1086 = vld [vmem:[%s2 + $0x530] sm:$0xff]
  %v1087 = vld [vmem:[%s2 + $0x538] sm:$0xff]
  %v1088 = vld [vmem:[%s2 + $0x540] sm:$0xff]
  %v1089 = vld [vmem:[%s2 + $0x548] sm:$0xff]
  %v1090 = vld [vmem:[%s2 + $0x550] sm:$0xff]
  %v1091 = vld [vmem:[%s2 + $0x558] sm:$0xff]
  %v1092 = vld [vmem:[%s2 + $0x560] sm:$0xff]
  %v1093 = vld [vmem:[%s2 + $0x568] sm:$0xff]
  %v1094 = vld [vmem:[%s2 + $0x570] sm:$0xff]
  %v1095 = vld [vmem:[%s2 + $0x578] sm:$0xff]
  %v1096 = vld [vmem:[%s2 + $0x580] sm:$0xff]
  %v1097 = vld [vmem:[%s2 + $0x588] sm:$0xff]
  %v1098 = vld [vmem:[%s2 + $0x590] sm:$0xff]
  %v1099 = vld [vmem:[%s2 + $0x598] sm:$0xff]
  %v1100 = vld [vmem:[%s2 + $0x5a0] sm:$0xff]
  %v1101 = vld [vmem:[%s2 + $0x5a8] sm:$0xff]
  %v1102 = vld [vmem:[%s2 + $0x5b0] sm:$0xff]
  %v1103 = vld [vmem:[%s2 + $0x5b8] sm:$0xff]
  %v1104 = vld [vmem:[%s2 + $0x5c0] sm:$0xff]
  %v1105 = vld [vmem:[%s2 + $0x5c8] sm:$0xff]
  %v1106 = vld [vmem:[%s2 + $0x5d0] sm:$0xff]
  %v1107 = vld [vmem:[%s2 + $0x5d8] sm:$0xff]
  %v1108 = vld [vmem:[%s2 + $0x5e0] sm:$0xff]
  %v1109 = vld [vmem:[%s2 + $0x5e8] sm:$0xff]
  %v1110 = vld [vmem:[%s2 + $0x5f0] sm:$0xff]
  %v1111 = vld [vmem:[%s2 + $0x5f8] sm:$0xff]
  %v1112 = vld [vmem:[%s2 + $0x600] sm:$0xff]
  %v1113 = vld [vmem:[%s2 + $0x608] sm:$0xff]
  %v1114 = vld [vmem:[%s2 + $0x610] sm:$0xff]
  %v1115 = vld [vmem:[%s2 + $0x618] sm:$0xff]
  %v1116 = vld [vmem:[%s2 + $0x620] sm:$0xff]
  %v1117 = vld [vmem:[%s2 + $0x628] sm:$0xff]
  %v1118 = vld [vmem:[%s2 + $0x630] sm:$0xff]
  %v1119 = vld [vmem:[%s2 + $0x638] sm:$0xff]
  %v1120 = vld [vmem:[%s2 + $0x640] sm:$0xff]
  %v1121 = vld [vmem:[%s2 + $0x648] sm:$0xff]
  %v1122 = vld [vmem:[%s2 + $0x650] sm:$0xff]
  %v1123 = vld [vmem:[%s2 + $0x658] sm:$0xff]
  %v1124 = vld [vmem:[%s2 + $0x660] sm:$0xff]
  %v1125 = vld [vmem:[%s2 + $0x668] sm:$0xff]
  %v1126 = vld [vmem:[%s2 + $0x670] sm:$0xff]
  %v1127 = vld [vmem:[%s2 + $0x678] sm:$0xff]
  %v1128 = vld [vmem:[%s2 + $0x680] sm:$0xff]
  %v1129 = vld [vmem:[%s2 + $0x688] sm:$0xff]
  %v1130 = vld [vmem:[%s2 + $0x690] sm:$0xff]
  %v1131 = vld [vmem:[%s2 + $0x698] sm:$0xff]
  %v1132 = vld [vmem:[%s2 + $0x6a0] sm:$0xff]
  %v1133 = vld [vmem:[%s2 + $0x6a8] sm:$0xff]
  %v1134 = vld [vmem:[%s2 + $0x6b0] sm:$0xff]
  %v1135 = vld [vmem:[%s2 + $0x6b8] sm:$0xff]
  %v1136 = vld [vmem:[%s2 + $0x6c0] sm:$0xff]
  %v1137 = vld [vmem:[%s2 + $0x6c8] sm:$0xff]
  %v1138 = vld [vmem:[%s2 + $0x6d0] sm:$0xff]
  %v1139 = vld [vmem:[%s2 + $0x6d8] sm:$0xff]
  %v1140 = vld [vmem:[%s2 + $0x6e0] sm:$0xff]
  %v1141 = vld [vmem:[%s2 + $0x6e8] sm:$0xff]
  %v1142 = vld [vmem:[%s2 + $0x6f0] sm:$0xff]
  %v1143 = vld [vmem:[%s2 + $0x6f8] sm:$0xff]
  %v1144 = vld [vmem:[%s2 + $0x700] sm:$0xff]
  %v1145 = vld [vmem:[%s2 + $0x708] sm:$0xff]
  %v1146 = vld [vmem:[%s2 + $0x710] sm:$0xff]
  %v1147 = vld [vmem:[%s2 + $0x718] sm:$0xff]
  %v1148 = vld [vmem:[%s2 + $0x720] sm:$0xff]
  %v1149 = vld [vmem:[%s2 + $0x728] sm:$0xff]
  %v1150 = vld [vmem:[%s2 + $0x730] sm:$0xff]
  %v1151 = vld [vmem:[%s2 + $0x738] sm:$0xff]
  %v1152 = vld [vmem:[%s2 + $0x740] sm:$0xff]
  %v1153 = vld [vmem:[%s2 + $0x748] sm:$0xff]
  %v1154 = vld [vmem:[%s2 + $0x750] sm:$0xff]
  %v1155 = vld [vmem:[%s2 + $0x758] sm:$0xff]
  %v1156 = vld [vmem:[%s2 + $0x760] sm:$0xff]
  %v1157 = vld [vmem:[%s2 + $0x768] sm:$0xff]
  %v1158 = vld [vmem:[%s2 + $0x770] sm:$0xff]
  %v1159 = vld [vmem:[%s2 + $0x778] sm:$0xff]
  %v1160 = vld [vmem:[%s2 + $0x780] sm:$0xff]
  %v1161 = vld [vmem:[%s2 + $0x788] sm:$0xff]
  %v1162 = vld [vmem:[%s2 + $0x790] sm:$0xff]
  %v1163 = vld [vmem:[%s2 + $0x798] sm:$0xff]
  %v1164 = vld [vmem:[%s2 + $0x7a0] sm:$0xff]
  %v1165 = vld [vmem:[%s2 + $0x7a8] sm:$0xff]
  %v1166 = vld [vmem:[%s2 + $0x7b0] sm:$0xff]
  %v1167 = vld [vmem:[%s2 + $0x7b8] sm:$0xff]
  %v1168 = vld [vmem:[%s2 + $0x7c0] sm:$0xff]
  %v1169 = vld [vmem:[%s2 + $0x7c8] sm:$0xff]
  %v1170 = vld [vmem:[%s2 + $0x7d0] sm:$0xff]
  %v1171 = vld [vmem:[%s2 + $0x7d8] sm:$0xff]
  %v1172 = vld [vmem:[%s2 + $0x7e0] sm:$0xff]
  %v1173 = vld [vmem:[%s2 + $0x7e8] sm:$0xff]
  %v1174 = vld [vmem:[%s2 + $0x7f0] sm:$0xff]
  %v1175 = vld [vmem:[%s2 + $0x7f8] sm:$0xff]
  %v1176 = vld [vmem:[%s6] sm:$0xf]
  %v1178 = vlaneseq
  %v1179 = vshrl.u32 %v1178, 7
  %v1180 = vsub.s32 0, %v1179
  %v1181 = vrot.slane %v1176, %v1180
  %v1182 = vlaneseq
  %v1183 = vshrl.u32 %v1182, 7
  %v1184 = vsub.s32 1, %v1183
  %v1185 = vrot.slane %v1176, %v1184
  %v1186 = vlaneseq
  %v1187 = vshrl.u32 %v1186, 7
  %v1188 = vsub.s32 2, %v1187
  %v1189 = vrot.slane %v1176, %v1188
  %v1190 = vlaneseq
  %v1191 = vshrl.u32 %v1190, 7
  %v1192 = vsub.s32 3, %v1191
  %v1193 = vrot.slane %v1176, %v1192
  %1198 = vmatprep.subr.mxu0 %v921
  %1199 = vmatpush1.msra.mxu0 %v920
  %1200 = vmatprep.subr.mxu0 %v925
  %1201 = vmatpush1.msra.mxu0 %v924
  %1202 = vmatprep.subr.mxu0 %v929
  %1203 = vmatpush1.msra.mxu0 %v928
  %1204 = vmatprep.subr.mxu0 %v933
  %1205 = vmatpush1.msra.mxu0 %v932
  %1206 = vmatprep.subr.mxu0 %v937
  %1207 = vmatpush1.msra.mxu0 %v936
  %1208 = vmatprep.subr.mxu0 %v941
  %1209 = vmatpush1.msra.mxu0 %v940
  %1210 = vmatprep.subr.mxu0 %v945
  %1211 = vmatpush1.msra.mxu0 %v944
  %1212 = vmatprep.subr.mxu0 %v949
  %1213 = vmatpush1.msra.mxu0 %v948
  %1214 = vmatprep.subr.mxu0 %v953
  %1215 = vmatpush1.msra.mxu0 %v952
  %1216 = vmatprep.subr.mxu0 %v957
  %1217 = vmatpush1.msra.mxu0 %v956
  %1218 = vmatprep.subr.mxu0 %v961
  %1219 = vmatpush1.msra.mxu0 %v960
  %1220 = vmatprep.subr.mxu0 %v965
  %1221 = vmatpush1.msra.mxu0 %v964
  %1222 = vmatprep.subr.mxu0 %v969
  %1223 = vmatpush1.msra.mxu0 %v968
  %1224 = vmatprep.subr.mxu0 %v973
  %1225 = vmatpush1.msra.mxu0 %v972
  %1226 = vmatprep.subr.mxu0 %v977
  %1227 = vmatpush1.msra.mxu0 %v976
  %1228 = vmatprep.subr.mxu0 %v981
  %1229 = vmatpush1.msra.mxu0 %v980
  %1230 = vmatprep.subr.mxu0 %v985
  %1231 = vmatpush1.msra.mxu0 %v984
  %1232 = vmatprep.subr.mxu0 %v989
  %1233 = vmatpush1.msra.mxu0 %v988
  %1234 = vmatprep.subr.mxu0 %v993
  %1235 = vmatpush1.msra.mxu0 %v992
  %1236 = vmatprep.subr.mxu0 %v997
  %1237 = vmatpush1.msra.mxu0 %v996
  %1238 = vmatprep.subr.mxu0 %v1001
  %1239 = vmatpush1.msra.mxu0 %v1000
  %1240 = vmatprep.subr.mxu0 %v1005
  %1241 = vmatpush1.msra.mxu0 %v1004
  %1242 = vmatprep.subr.mxu0 %v1009
  %1243 = vmatpush1.msra.mxu0 %v1008
  %1244 = vmatprep.subr.mxu0 %v1013
  %1245 = vmatpush1.msra.mxu0 %v1012
  %1246 = vmatprep.subr.mxu0 %v1017
  %1247 = vmatpush1.msra.mxu0 %v1016
  %1248 = vmatprep.subr.mxu0 %v1021
  %1249 = vmatpush1.msra.mxu0 %v1020
  %1250 = vmatprep.subr.mxu0 %v1025
  %1251 = vmatpush1.msra.mxu0 %v1024
  %1252 = vmatprep.subr.mxu0 %v1029
  %1253 = vmatpush1.msra.mxu0 %v1028
  %1254 = vmatprep.subr.mxu0 %v1033
  %1255 = vmatpush1.msra.mxu0 %v1032
  %1256 = vmatprep.subr.mxu0 %v1037
  %1257 = vmatpush1.msra.mxu0 %v1036
  %1258 = vmatprep.subr.mxu0 %v1041
  %1259 = vmatpush1.msra.mxu0 %v1040
  %1260 = vmatprep.subr.mxu0 %v1045
  %1261 = vmatpush1.msra.mxu0 %v1044
  %1262 = vmatprep.mubr.f32.mxu0 %v913
  %1263 = vmatmul.mubr.f32.gmra.mrb[0].mxu0 %v912
  %v1264 = vpop.f32.mrb[0].mxu0
  %v1265 = vadd.f32 %v1181, %v1264
  %v1266 = vpop.f32.mrb[0].mxu0
  %v1267 = vadd.f32 %v1185, %v1266
  %1268 = vmatprep.mubr.f32.mxu0 %v917
  %1269 = vmatmul.mubr.f32.gmra.mrb[0].mxu0 %v916
  %v1270 = vpop.f32.mrb[0].mxu0
  %v1271 = vadd.f32 %v1181, %v1270
  %v1272 = vpop.f32.mrb[0].mxu0
  %v1273 = vadd.f32 %v1185, %v1272
  %1274 = vdwg.mxu0
  %1275 = vmatprep.subr.mxu0 %v1049
  %1276 = vmatpush1.msra.mxu0 %v1048
  %1277 = vmatprep.subr.mxu0 %v1053
  %1278 = vmatpush1.msra.mxu0 %v1052
  %1279 = vmatprep.subr.mxu0 %v1057
  %1280 = vmatpush1.msra.mxu0 %v1056
  %1281 = vmatprep.subr.mxu0 %v1061
  %1282 = vmatpush1.msra.mxu0 %v1060
  %1283 = vmatprep.subr.mxu0 %v1065
  %1284 = vmatpush1.msra.mxu0 %v1064
  %1285 = vmatprep.subr.mxu0 %v1069
  %1286 = vmatpush1.msra.mxu0 %v1068
  %1287 = vmatprep.subr.mxu0 %v1073
  %1288 = vmatpush1.msra.mxu0 %v1072
  %1289 = vmatprep.subr.mxu0 %v1077
  %1290 = vmatpush1.msra.mxu0 %v1076
  %1291 = vmatprep.subr.mxu0 %v1081
  %1292 = vmatpush1.msra.mxu0 %v1080
  %1293 = vmatprep.subr.mxu0 %v1085
  %1294 = vmatpush1.msra.mxu0 %v1084
  %1295 = vmatprep.subr.mxu0 %v1089
  %1296 = vmatpush1.msra.mxu0 %v1088
  %1297 = vmatprep.subr.mxu0 %v1093
  %1298 = vmatpush1.msra.mxu0 %v1092
  %1299 = vmatprep.subr.mxu0 %v1097
  %1300 = vmatpush1.msra.mxu0 %v1096
  %1301 = vmatprep.subr.mxu0 %v1101
  %1302 = vmatpush1.msra.mxu0 %v1100
  %1303 = vmatprep.subr.mxu0 %v1105
  %1304 = vmatpush1.msra.mxu0 %v1104
  %1305 = vmatprep.subr.mxu0 %v1109
  %1306 = vmatpush1.msra.mxu0 %v1108
  %1307 = vmatprep.subr.mxu0 %v1113
  %1308 = vmatpush1.msra.mxu0 %v1112
  %1309 = vmatprep.subr.mxu0 %v1117
  %1310 = vmatpush1.msra.mxu0 %v1116
  %1311 = vmatprep.subr.mxu0 %v1121
  %1312 = vmatpush1.msra.mxu0 %v1120
  %1313 = vmatprep.subr.mxu0 %v1125
  %1314 = vmatpush1.msra.mxu0 %v1124
  %1315 = vmatprep.subr.mxu0 %v1129
  %1316 = vmatpush1.msra.mxu0 %v1128
  %1317 = vmatprep.subr.mxu0 %v1133
  %1318 = vmatpush1.msra.mxu0 %v1132
  %1319 = vmatprep.subr.mxu0 %v1137
  %1320 = vmatpush1.msra.mxu0 %v1136
  %1321 = vmatprep.subr.mxu0 %v1141
  %1322 = vmatpush1.msra.mxu0 %v1140
  %1323 = vmatprep.subr.mxu0 %v1145
  %1324 = vmatpush1.msra.mxu0 %v1144
  %1325 = vmatprep.subr.mxu0 %v1149
  %1326 = vmatpush1.msra.mxu0 %v1148
  %1327 = vmatprep.subr.mxu0 %v1153
  %1328 = vmatpush1.msra.mxu0 %v1152
  %1329 = vmatprep.subr.mxu0 %v1157
  %1330 = vmatpush1.msra.mxu0 %v1156
  %1331 = vmatprep.subr.mxu0 %v1161
  %1332 = vmatpush1.msra.mxu0 %v1160
  %1333 = vmatprep.subr.mxu0 %v1165
  %1334 = vmatpush1.msra.mxu0 %v1164
  %1335 = vmatprep.subr.mxu0 %v1169
  %1336 = vmatpush1.msra.mxu0 %v1168
  %1337 = vmatprep.subr.mxu0 %v1173
  %1338 = vmatpush1.msra.mxu0 %v1172
  %1339 = vmatprep.mubr.f32.mxu0 %v915
  %1340 = vmatmul.mubr.f32.gmra.mrb[0].mxu0 %v914
  %v1341 = vpop.f32.mrb[0].mxu0
  %v1342 = vadd.f32 %v1265, %v1341
  %v1343 = vpop.f32.mrb[0].mxu0
  %v1344 = vadd.f32 %v1267, %v1343
  %1345 = vmatprep.mubr.f32.mxu0 %v919
  %1346 = vmatmul.mubr.f32.gmra.mrb[0].mxu0 %v918
  %v1347 = vpop.f32.mrb[0].mxu0
  %v1348 = vadd.f32 %v1271, %v1347
  %v1349 = vpop.f32.mrb[0].mxu0
  %v1350 = vadd.f32 %v1273, %v1349
  %1351 = vdwg.mxu0
  %1352 = vmatprep.subr.mxu0 %v923
  %1353 = vmatpush1.msra.mxu0 %v922
  %1354 = vmatprep.subr.mxu0 %v927
  %1355 = vmatpush1.msra.mxu0 %v926
  %1356 = vmatprep.subr.mxu0 %v931
  %1357 = vmatpush1.msra.mxu0 %v930
  %1358 = vmatprep.subr.mxu0 %v935
  %1359 = vmatpush1.msra.mxu0 %v934
  %1360 = vmatprep.subr.mxu0 %v939
  %1361 = vmatpush1.msra.mxu0 %v938
  %1362 = vmatprep.subr.mxu0 %v943
  %1363 = vmatpush1.msra.mxu0 %v942
  %1364 = vmatprep.subr.mxu0 %v947
  %1365 = vmatpush1.msra.mxu0 %v946
  %1366 = vmatprep.subr.mxu0 %v951
  %1367 = vmatpush1.msra.mxu0 %v950
  %1368 = vmatprep.subr.mxu0 %v955
  %1369 = vmatpush1.msra.mxu0 %v954
  %1370 = vmatprep.subr.mxu0 %v959
  %1371 = vmatpush1.msra.mxu0 %v958
  %1372 = vmatprep.subr.mxu0 %v963
  %1373 = vmatpush1.msra.mxu0 %v962
  %1374 = vmatprep.subr.mxu0 %v967
  %1375 = vmatpush1.msra.mxu0 %v966
  %1376 = vmatprep.subr.mxu0 %v971
  %1377 = vmatpush1.msra.mxu0 %v970
  %1378 = vmatprep.subr.mxu0 %v975
  %1379 = vmatpush1.msra.mxu0 %v974
  %1380 = vmatprep.subr.mxu0 %v979
  %1381 = vmatpush1.msra.mxu0 %v978
  %1382 = vmatprep.subr.mxu0 %v983
  %1383 = vmatpush1.msra.mxu0 %v982
  %1384 = vmatprep.subr.mxu0 %v987
  %1385 = vmatpush1.msra.mxu0 %v986
  %1386 = vmatprep.subr.mxu0 %v991
  %1387 = vmatpush1.msra.mxu0 %v990
  %1388 = vmatprep.subr.mxu0 %v995
  %1389 = vmatpush1.msra.mxu0 %v994
  %1390 = vmatprep.subr.mxu0 %v999
  %1391 = vmatpush1.msra.mxu0 %v998
  %1392 = vmatprep.subr.mxu0 %v1003
  %1393 = vmatpush1.msra.mxu0 %v1002
  %1394 = vmatprep.subr.mxu0 %v1007
  %1395 = vmatpush1.msra.mxu0 %v1006
  %1396 = vmatprep.subr.mxu0 %v1011
  %1397 = vmatpush1.msra.mxu0 %v1010
  %1398 = vmatprep.subr.mxu0 %v1015
  %1399 = vmatpush1.msra.mxu0 %v1014
  %1400 = vmatprep.subr.mxu0 %v1019
  %1401 = vmatpush1.msra.mxu0 %v1018
  %1402 = vmatprep.subr.mxu0 %v1023
  %1403 = vmatpush1.msra.mxu0 %v1022
  %1404 = vmatprep.subr.mxu0 %v1027
  %1405 = vmatpush1.msra.mxu0 %v1026
  %1406 = vmatprep.subr.mxu0 %v1031
  %1407 = vmatpush1.msra.mxu0 %v1030
  %1408 = vmatprep.subr.mxu0 %v1035
  %1409 = vmatpush1.msra.mxu0 %v1034
  %1410 = vmatprep.subr.mxu0 %v1039
  %1411 = vmatpush1.msra.mxu0 %v1038
  %1412 = vmatprep.subr.mxu0 %v1043
  %1413 = vmatpush1.msra.mxu0 %v1042
  %1414 = vmatprep.subr.mxu0 %v1047
  %1415 = vmatpush1.msra.mxu0 %v1046
  %1416 = vmatprep.mubr.f32.mxu0 %v913
  %1417 = vmatmul.mubr.f32.gmra.mrb[0].mxu0 %v912
  %v1418 = vpop.f32.mrb[0].mxu0
  %v1419 = vadd.f32 %v1189, %v1418
  %v1420 = vpop.f32.mrb[0].mxu0
  %v1421 = vadd.f32 %v1193, %v1420
  %1422 = vmatprep.mubr.f32.mxu0 %v917
  %1423 = vmatmul.mubr.f32.gmra.mrb[0].mxu0 %v916
  %v1424 = vpop.f32.mrb[0].mxu0
  %v1425 = vadd.f32 %v1189, %v1424
  %v1426 = vpop.f32.mrb[0].mxu0
  %v1427 = vadd.f32 %v1193, %v1426
  %1428 = vdwg.mxu0
  %1429 = vmatprep.subr.mxu0 %v1051
  %1430 = vmatpush1.msra.mxu0 %v1050
  %1431 = vmatprep.subr.mxu0 %v1055
  %1432 = vmatpush1.msra.mxu0 %v1054
  %1433 = vmatprep.subr.mxu0 %v1059
  %1434 = vmatpush1.msra.mxu0 %v1058
  %1435 = vmatprep.subr.mxu0 %v1063
  %1436 = vmatpush1.msra.mxu0 %v1062
  %1437 = vmatprep.subr.mxu0 %v1067
  %1438 = vmatpush1.msra.mxu0 %v1066
  %1439 = vmatprep.subr.mxu0 %v1071
  %1440 = vmatpush1.msra.mxu0 %v1070
  %1441 = vmatprep.subr.mxu0 %v1075
  %1442 = vmatpush1.msra.mxu0 %v1074
  %1443 = vmatprep.subr.mxu0 %v1079
  %1444 = vmatpush1.msra.mxu0 %v1078
  %1445 = vmatprep.subr.mxu0 %v1083
  %1446 = vmatpush1.msra.mxu0 %v1082
  %1447 = vmatprep.subr.mxu0 %v1087
  %1448 = vmatpush1.msra.mxu0 %v1086
  %1449 = vmatprep.subr.mxu0 %v1091
  %1450 = vmatpush1.msra.mxu0 %v1090
  %1451 = vmatprep.subr.mxu0 %v1095
  %1452 = vmatpush1.msra.mxu0 %v1094
  %1453 = vmatprep.subr.mxu0 %v1099
  %1454 = vmatpush1.msra.mxu0 %v1098
  %1455 = vmatprep.subr.mxu0 %v1103
  %1456 = vmatpush1.msra.mxu0 %v1102
  %1457 = vmatprep.subr.mxu0 %v1107
  %1458 = vmatpush1.msra.mxu0 %v1106
  %1459 = vmatprep.subr.mxu0 %v1111
  %1460 = vmatpush1.msra.mxu0 %v1110
  %1461 = vmatprep.subr.mxu0 %v1115
  %1462 = vmatpush1.msra.mxu0 %v1114
  %1463 = vmatprep.subr.mxu0 %v1119
  %1464 = vmatpush1.msra.mxu0 %v1118
  %1465 = vmatprep.subr.mxu0 %v1123
  %1466 = vmatpush1.msra.mxu0 %v1122
  %1467 = vmatprep.subr.mxu0 %v1127
  %1468 = vmatpush1.msra.mxu0 %v1126
  %1469 = vmatprep.subr.mxu0 %v1131
  %1470 = vmatpush1.msra.mxu0 %v1130
  %1471 = vmatprep.subr.mxu0 %v1135
  %1472 = vmatpush1.msra.mxu0 %v1134
  %1473 = vmatprep.subr.mxu0 %v1139
  %1474 = vmatpush1.msra.mxu0 %v1138
  %1475 = vmatprep.subr.mxu0 %v1143
  %1476 = vmatpush1.msra.mxu0 %v1142
  %1477 = vmatprep.subr.mxu0 %v1147
  %1478 = vmatpush1.msra.mxu0 %v1146
  %1479 = vmatprep.subr.mxu0 %v1151
  %1480 = vmatpush1.msra.mxu0 %v1150
  %1481 = vmatprep.subr.mxu0 %v1155
  %1482 = vmatpush1.msra.mxu0 %v1154
  %1483 = vmatprep.subr.mxu0 %v1159
  %1484 = vmatpush1.msra.mxu0 %v1158
  %1485 = vmatprep.subr.mxu0 %v1163
  %1486 = vmatpush1.msra.mxu0 %v1162
  %1487 = vmatprep.subr.mxu0 %v1167
  %1488 = vmatpush1.msra.mxu0 %v1166
  %1489 = vmatprep.subr.mxu0 %v1171
  %1490 = vmatpush1.msra.mxu0 %v1170
  %1491 = vmatprep.subr.mxu0 %v1175
  %1492 = vmatpush1.msra.mxu0 %v1174
  %1493 = vmatprep.mubr.f32.mxu0 %v915
  %1494 = vmatmul.mubr.f32.gmra.mrb[0].mxu0 %v914
  %v1495 = vpop.f32.mrb[0].mxu0
  %v1496 = vadd.f32 %v1419, %v1495
  %v1497 = vpop.f32.mrb[0].mxu0
  %v1498 = vadd.f32 %v1421, %v1497
  %1499 = vmatprep.mubr.f32.mxu0 %v919
  %1500 = vmatmul.mubr.f32.gmra.mrb[0].mxu0 %v918
  %v1501 = vpop.f32.mrb[0].mxu0
  %v1502 = vadd.f32 %v1425, %v1501
  %v1503 = vpop.f32.mrb[0].mxu0
  %v1504 = vadd.f32 %v1427, %v1503
  %1505 = vdwg.mxu0
  %v1506 = vmax.f32 %v1342, 0.0
  %v1507 = vmax.f32 %v1344, 0.0
  %v1508 = vmax.f32 %v1496, 0.0
  %v1509 = vmax.f32 %v1498, 0.0
  %v1510 = vmax.f32 %v1348, 0.0
  %v1511 = vmax.f32 %v1350, 0.0
  %v1512 = vmax.f32 %v1502, 0.0
  %v1513 = vmax.f32 %v1504, 0.0
  %v1514 = vld [vmem:[%s3] sm:$0xff]
  %v1515 = vld [vmem:[%s3 + $0x8] sm:$0xff]
  %v1516 = vld [vmem:[%s3 + $0x10] sm:$0xff]
  %v1517 = vld [vmem:[%s3 + $0x18] sm:$0xff]
  %v1518 = vld [vmem:[%s3 + $0x20] sm:$0xff]
  %v1519 = vld [vmem:[%s3 + $0x28] sm:$0xff]
  %v1520 = vld [vmem:[%s3 + $0x30] sm:$0xff]
  %v1521 = vld [vmem:[%s3 + $0x38] sm:$0xff]
  %v1522 = vld [vmem:[%s3 + $0x40] sm:$0xff]
  %v1523 = vld [vmem:[%s3 + $0x48] sm:$0xff]
  %v1524 = vld [vmem:[%s3 + $0x50] sm:$0xff]
  %v1525 = vld [vmem:[%s3 + $0x58] sm:$0xff]
  %v1526 = vld [vmem:[%s3 + $0x60] sm:$0xff]
  %v1527 = vld [vmem:[%s3 + $0x68] sm:$0xff]
  %v1528 = vld [vmem:[%s3 + $0x70] sm:$0xff]
  %v1529 = vld [vmem:[%s3 + $0x78] sm:$0xff]
  %v1530 = vld [vmem:[%s3 + $0x80] sm:$0xff]
  %v1531 = vld [vmem:[%s3 + $0x88] sm:$0xff]
  %v1532 = vld [vmem:[%s3 + $0x90] sm:$0xff]
  %v1533 = vld [vmem:[%s3 + $0x98] sm:$0xff]
  %v1534 = vld [vmem:[%s3 + $0xa0] sm:$0xff]
  %v1535 = vld [vmem:[%s3 + $0xa8] sm:$0xff]
  %v1536 = vld [vmem:[%s3 + $0xb0] sm:$0xff]
  %v1537 = vld [vmem:[%s3 + $0xb8] sm:$0xff]
  %v1538 = vld [vmem:[%s3 + $0xc0] sm:$0xff]
  %v1539 = vld [vmem:[%s3 + $0xc8] sm:$0xff]
  %v1540 = vld [vmem:[%s3 + $0xd0] sm:$0xff]
  %v1541 = vld [vmem:[%s3 + $0xd8] sm:$0xff]
  %v1542 = vld [vmem:[%s3 + $0xe0] sm:$0xff]
  %v1543 = vld [vmem:[%s3 + $0xe8] sm:$0xff]
  %v1544 = vld [vmem:[%s3 + $0xf0] sm:$0xff]
  %v1545 = vld [vmem:[%s3 + $0xf8] sm:$0xff]
  %v1546 = vld [vmem:[%s3 + $0x100] sm:$0xff]
  %v1547 = vld [vmem:[%s3 + $0x108] sm:$0xff]
  %v1548 = vld [vmem:[%s3 + $0x110] sm:$0xff]
  %v1549 = vld [vmem:[%s3 + $0x118] sm:$0xff]
  %v1550 = vld [vmem:[%s3 + $0x120] sm:$0xff]
  %v1551 = vld [vmem:[%s3 + $0x128] sm:$0xff]
  %v1552 = vld [vmem:[%s3 + $0x130] sm:$0xff]
  %v1553 = vld [vmem:[%s3 + $0x138] sm:$0xff]
  %v1554 = vld [vmem:[%s3 + $0x140] sm:$0xff]
  %v1555 = vld [vmem:[%s3 + $0x148] sm:$0xff]
  %v1556 = vld [vmem:[%s3 + $0x150] sm:$0xff]
  %v1557 = vld [vmem:[%s3 + $0x158] sm:$0xff]
  %v1558 = vld [vmem:[%s3 + $0x160] sm:$0xff]
  %v1559 = vld [vmem:[%s3 + $0x168] sm:$0xff]
  %v1560 = vld [vmem:[%s3 + $0x170] sm:$0xff]
  %v1561 = vld [vmem:[%s3 + $0x178] sm:$0xff]
  %v1562 = vld [vmem:[%s3 + $0x180] sm:$0xff]
  %v1563 = vld [vmem:[%s3 + $0x188] sm:$0xff]
  %v1564 = vld [vmem:[%s3 + $0x190] sm:$0xff]
  %v1565 = vld [vmem:[%s3 + $0x198] sm:$0xff]
  %v1566 = vld [vmem:[%s3 + $0x1a0] sm:$0xff]
  %v1567 = vld [vmem:[%s3 + $0x1a8] sm:$0xff]
  %v1568 = vld [vmem:[%s3 + $0x1b0] sm:$0xff]
  %v1569 = vld [vmem:[%s3 + $0x1b8] sm:$0xff]
  %v1570 = vld [vmem:[%s3 + $0x1c0] sm:$0xff]
  %v1571 = vld [vmem:[%s3 + $0x1c8] sm:$0xff]
  %v1572 = vld [vmem:[%s3 + $0x1d0] sm:$0xff]
  %v1573 = vld [vmem:[%s3 + $0x1d8] sm:$0xff]
  %v1574 = vld [vmem:[%s3 + $0x1e0] sm:$0xff]
  %v1575 = vld [vmem:[%s3 + $0x1e8] sm:$0xff]
  %v1576 = vld [vmem:[%s3 + $0x1f0] sm:$0xff]
  %v1577 = vld [vmem:[%s3 + $0x1f8] sm:$0xff]
  %v1578 = vld [vmem:[%s3 + $0x200] sm:$0xff]
  %v1579 = vld [vmem:[%s3 + $0x208] sm:$0xff]
  %v1580 = vld [vmem:[%s3 + $0x210] sm:$0xff]
  %v1581 = vld [vmem:[%s3 + $0x218] sm:$0xff]
  %v1582 = vld [vmem:[%s3 + $0x220] sm:$0xff]
  %v1583 = vld [vmem:[%s3 + $0x228] sm:$0xff]
  %v1584 = vld [vmem:[%s3 + $0x230] sm:$0xff]
  %v1585 = vld [vmem:[%s3 + $0x238] sm:$0xff]
  %v1586 = vld [vmem:[%s3 + $0x240] sm:$0xff]
  %v1587 = vld [vmem:[%s3 + $0x248] sm:$0xff]
  %v1588 = vld [vmem:[%s3 + $0x250] sm:$0xff]
  %v1589 = vld [vmem:[%s3 + $0x258] sm:$0xff]
  %v1590 = vld [vmem:[%s3 + $0x260] sm:$0xff]
  %v1591 = vld [vmem:[%s3 + $0x268] sm:$0xff]
  %v1592 = vld [vmem:[%s3 + $0x270] sm:$0xff]
  %v1593 = vld [vmem:[%s3 + $0x278] sm:$0xff]
  %v1594 = vld [vmem:[%s3 + $0x280] sm:$0xff]
  %v1595 = vld [vmem:[%s3 + $0x288] sm:$0xff]
  %v1596 = vld [vmem:[%s3 + $0x290] sm:$0xff]
  %v1597 = vld [vmem:[%s3 + $0x298] sm:$0xff]
  %v1598 = vld [vmem:[%s3 + $0x2a0] sm:$0xff]
  %v1599 = vld [vmem:[%s3 + $0x2a8] sm:$0xff]
  %v1600 = vld [vmem:[%s3 + $0x2b0] sm:$0xff]
  %v1601 = vld [vmem:[%s3 + $0x2b8] sm:$0xff]
  %v1602 = vld [vmem:[%s3 + $0x2c0] sm:$0xff]
  %v1603 = vld [vmem:[%s3 + $0x2c8] sm:$0xff]
  %v1604 = vld [vmem:[%s3 + $0x2d0] sm:$0xff]
  %v1605 = vld [vmem:[%s3 + $0x2d8] sm:$0xff]
  %v1606 = vld [vmem:[%s3 + $0x2e0] sm:$0xff]
  %v1607 = vld [vmem:[%s3 + $0x2e8] sm:$0xff]
  %v1608 = vld [vmem:[%s3 + $0x2f0] sm:$0xff]
  %v1609 = vld [vmem:[%s3 + $0x2f8] sm:$0xff]
  %v1610 = vld [vmem:[%s3 + $0x300] sm:$0xff]
  %v1611 = vld [vmem:[%s3 + $0x308] sm:$0xff]
  %v1612 = vld [vmem:[%s3 + $0x310] sm:$0xff]
  %v1613 = vld [vmem:[%s3 + $0x318] sm:$0xff]
  %v1614 = vld [vmem:[%s3 + $0x320] sm:$0xff]
  %v1615 = vld [vmem:[%s3 + $0x328] sm:$0xff]
  %v1616 = vld [vmem:[%s3 + $0x330] sm:$0xff]
  %v1617 = vld [vmem:[%s3 + $0x338] sm:$0xff]
  %v1618 = vld [vmem:[%s3 + $0x340] sm:$0xff]
  %v1619 = vld [vmem:[%s3 + $0x348] sm:$0xff]
  %v1620 = vld [vmem:[%s3 + $0x350] sm:$0xff]
  %v1621 = vld [vmem:[%s3 + $0x358] sm:$0xff]
  %v1622 = vld [vmem:[%s3 + $0x360] sm:$0xff]
  %v1623 = vld [vmem:[%s3 + $0x368] sm:$0xff]
  %v1624 = vld [vmem:[%s3 + $0x370] sm:$0xff]
  %v1625 = vld [vmem:[%s3 + $0x378] sm:$0xff]
  %v1626 = vld [vmem:[%s3 + $0x380] sm:$0xff]
  %v1627 = vld [vmem:[%s3 + $0x388] sm:$0xff]
  %v1628 = vld [vmem:[%s3 + $0x390] sm:$0xff]
  %v1629 = vld [vmem:[%s3 + $0x398] sm:$0xff]
  %v1630 = vld [vmem:[%s3 + $0x3a0] sm:$0xff]
  %v1631 = vld [vmem:[%s3 + $0x3a8] sm:$0xff]
  %v1632 = vld [vmem:[%s3 + $0x3b0] sm:$0xff]
  %v1633 = vld [vmem:[%s3 + $0x3b8] sm:$0xff]
  %v1634 = vld [vmem:[%s3 + $0x3c0] sm:$0xff]
  %v1635 = vld [vmem:[%s3 + $0x3c8] sm:$0xff]
  %v1636 = vld [vmem:[%s3 + $0x3d0] sm:$0xff]
  %v1637 = vld [vmem:[%s3 + $0x3d8] sm:$0xff]
  %v1638 = vld [vmem:[%s3 + $0x3e0] sm:$0xff]
  %v1639 = vld [vmem:[%s3 + $0x3e8] sm:$0xff]
  %v1640 = vld [vmem:[%s3 + $0x3f0] sm:$0xff]
  %v1641 = vld [vmem:[%s3 + $0x3f8] sm:$0xff]
  %v1642 = vld [vmem:[%s7] sm:$0x3]
  %v1644 = vlaneseq
  %v1645 = vshrl.u32 %v1644, 7
  %v1646 = vsub.s32 0, %v1645
  %v1647 = vrot.slane %v1642, %v1646
  %v1648 = vlaneseq
  %v1649 = vshrl.u32 %v1648, 7
  %v1650 = vsub.s32 1, %v1649
  %v1651 = vrot.slane %v1642, %v1650
  %1654 = vmatprep.subr.mxu0 %v1515
  %1655 = vmatpush1.msra.mxu0 %v1514
  %1656 = vmatprep.subr.mxu0 %v1517
  %1657 = vmatpush1.msra.mxu0 %v1516
  %1658 = vmatprep.subr.mxu0 %v1519
  %1659 = vmatpush1.msra.mxu0 %v1518
  %1660 = vmatprep.subr.mxu0 %v1521
  %1661 = vmatpush1.msra.mxu0 %v1520
  %1662 = vmatprep.subr.mxu0 %v1523
  %1663 = vmatpush1.msra.mxu0 %v1522
  %1664 = vmatprep.subr.mxu0 %v1525
  %1665 = vmatpush1.msra.mxu0 %v1524
  %1666 = vmatprep.subr.mxu0 %v1527
  %1667 = vmatpush1.msra.mxu0 %v1526
  %1668 = vmatprep.subr.mxu0 %v1529
  %1669 = vmatpush1.msra.mxu0 %v1528
  %1670 = vmatprep.subr.mxu0 %v1531
  %1671 = vmatpush1.msra.mxu0 %v1530
  %1672 = vmatprep.subr.mxu0 %v1533
  %1673 = vmatpush1.msra.mxu0 %v1532
  %1674 = vmatprep.subr.mxu0 %v1535
  %1675 = vmatpush1.msra.mxu0 %v1534
  %1676 = vmatprep.subr.mxu0 %v1537
  %1677 = vmatpush1.msra.mxu0 %v1536
  %1678 = vmatprep.subr.mxu0 %v1539
  %1679 = vmatpush1.msra.mxu0 %v1538
  %1680 = vmatprep.subr.mxu0 %v1541
  %1681 = vmatpush1.msra.mxu0 %v1540
  %1682 = vmatprep.subr.mxu0 %v1543
  %1683 = vmatpush1.msra.mxu0 %v1542
  %1684 = vmatprep.subr.mxu0 %v1545
  %1685 = vmatpush1.msra.mxu0 %v1544
  %1686 = vmatprep.subr.mxu0 %v1547
  %1687 = vmatpush1.msra.mxu0 %v1546
  %1688 = vmatprep.subr.mxu0 %v1549
  %1689 = vmatpush1.msra.mxu0 %v1548
  %1690 = vmatprep.subr.mxu0 %v1551
  %1691 = vmatpush1.msra.mxu0 %v1550
  %1692 = vmatprep.subr.mxu0 %v1553
  %1693 = vmatpush1.msra.mxu0 %v1552
  %1694 = vmatprep.subr.mxu0 %v1555
  %1695 = vmatpush1.msra.mxu0 %v1554
  %1696 = vmatprep.subr.mxu0 %v1557
  %1697 = vmatpush1.msra.mxu0 %v1556
  %1698 = vmatprep.subr.mxu0 %v1559
  %1699 = vmatpush1.msra.mxu0 %v1558
  %1700 = vmatprep.subr.mxu0 %v1561
  %1701 = vmatpush1.msra.mxu0 %v1560
  %1702 = vmatprep.subr.mxu0 %v1563
  %1703 = vmatpush1.msra.mxu0 %v1562
  %1704 = vmatprep.subr.mxu0 %v1565
  %1705 = vmatpush1.msra.mxu0 %v1564
  %1706 = vmatprep.subr.mxu0 %v1567
  %1707 = vmatpush1.msra.mxu0 %v1566
  %1708 = vmatprep.subr.mxu0 %v1569
  %1709 = vmatpush1.msra.mxu0 %v1568
  %1710 = vmatprep.subr.mxu0 %v1571
  %1711 = vmatpush1.msra.mxu0 %v1570
  %1712 = vmatprep.subr.mxu0 %v1573
  %1713 = vmatpush1.msra.mxu0 %v1572
  %1714 = vmatprep.subr.mxu0 %v1575
  %1715 = vmatpush1.msra.mxu0 %v1574
  %1716 = vmatprep.subr.mxu0 %v1577
  %1717 = vmatpush1.msra.mxu0 %v1576
  %1718 = vmatprep.mubr.f32.mxu0 %v1507
  %1719 = vmatmul.mubr.f32.gmra.mrb[0].mxu0 %v1506
  %v1720 = vpop.f32.mrb[0].mxu0
  %v1721 = vadd.f32 %v1647, %v1720
  %v1722 = vpop.f32.mrb[0].mxu0
  %v1723 = vadd.f32 %v1651, %v1722
  %1724 = vmatprep.mubr.f32.mxu0 %v1511
  %1725 = vmatmul.mubr.f32.gmra.mrb[0].mxu0 %v1510
  %v1726 = vpop.f32.mrb[0].mxu0
  %v1727 = vadd.f32 %v1647, %v1726
  %v1728 = vpop.f32.mrb[0].mxu0
  %v1729 = vadd.f32 %v1651, %v1728
  %1730 = vdwg.mxu0
  %1731 = vmatprep.subr.mxu0 %v1579
  %1732 = vmatpush1.msra.mxu0 %v1578
  %1733 = vmatprep.subr.mxu0 %v1581
  %1734 = vmatpush1.msra.mxu0 %v1580
  %1735 = vmatprep.subr.mxu0 %v1583
  %1736 = vmatpush1.msra.mxu0 %v1582
  %1737 = vmatprep.subr.mxu0 %v1585
  %1738 = vmatpush1.msra.mxu0 %v1584
  %1739 = vmatprep.subr.mxu0 %v1587
  %1740 = vmatpush1.msra.mxu0 %v1586
  %1741 = vmatprep.subr.mxu0 %v1589
  %1742 = vmatpush1.msra.mxu0 %v1588
  %1743 = vmatprep.subr.mxu0 %v1591
  %1744 = vmatpush1.msra.mxu0 %v1590
  %1745 = vmatprep.subr.mxu0 %v1593
  %1746 = vmatpush1.msra.mxu0 %v1592
  %1747 = vmatprep.subr.mxu0 %v1595
  %1748 = vmatpush1.msra.mxu0 %v1594
  %1749 = vmatprep.subr.mxu0 %v1597
  %1750 = vmatpush1.msra.mxu0 %v1596
  %1751 = vmatprep.subr.mxu0 %v1599
  %1752 = vmatpush1.msra.mxu0 %v1598
  %1753 = vmatprep.subr.mxu0 %v1601
  %1754 = vmatpush1.msra.mxu0 %v1600
  %1755 = vmatprep.subr.mxu0 %v1603
  %1756 = vmatpush1.msra.mxu0 %v1602
  %1757 = vmatprep.subr.mxu0 %v1605
  %1758 = vmatpush1.msra.mxu0 %v1604
  %1759 = vmatprep.subr.mxu0 %v1607
  %1760 = vmatpush1.msra.mxu0 %v1606
  %1761 = vmatprep.subr.mxu0 %v1609
  %1762 = vmatpush1.msra.mxu0 %v1608
  %1763 = vmatprep.subr.mxu0 %v1611
  %1764 = vmatpush1.msra.mxu0 %v1610
  %1765 = vmatprep.subr.mxu0 %v1613
  %1766 = vmatpush1.msra.mxu0 %v1612
  %1767 = vmatprep.subr.mxu0 %v1615
  %1768 = vmatpush1.msra.mxu0 %v1614
  %1769 = vmatprep.subr.mxu0 %v1617
  %1770 = vmatpush1.msra.mxu0 %v1616
  %1771 = vmatprep.subr.mxu0 %v1619
  %1772 = vmatpush1.msra.mxu0 %v1618
  %1773 = vmatprep.subr.mxu0 %v1621
  %1774 = vmatpush1.msra.mxu0 %v1620
  %1775 = vmatprep.subr.mxu0 %v1623
  %1776 = vmatpush1.msra.mxu0 %v1622
  %1777 = vmatprep.subr.mxu0 %v1625
  %1778 = vmatpush1.msra.mxu0 %v1624
  %1779 = vmatprep.subr.mxu0 %v1627
  %1780 = vmatpush1.msra.mxu0 %v1626
  %1781 = vmatprep.subr.mxu0 %v1629
  %1782 = vmatpush1.msra.mxu0 %v1628
  %1783 = vmatprep.subr.mxu0 %v1631
  %1784 = vmatpush1.msra.mxu0 %v1630
  %1785 = vmatprep.subr.mxu0 %v1633
  %1786 = vmatpush1.msra.mxu0 %v1632
  %1787 = vmatprep.subr.mxu0 %v1635
  %1788 = vmatpush1.msra.mxu0 %v1634
  %1789 = vmatprep.subr.mxu0 %v1637
  %1790 = vmatpush1.msra.mxu0 %v1636
  %1791 = vmatprep.subr.mxu0 %v1639
  %1792 = vmatpush1.msra.mxu0 %v1638
  %1793 = vmatprep.subr.mxu0 %v1641
  %1794 = vmatpush1.msra.mxu0 %v1640
  %1795 = vmatprep.mubr.f32.mxu0 %v1509
  %1796 = vmatmul.mubr.f32.gmra.mrb[0].mxu0 %v1508
  %v1797 = vpop.f32.mrb[0].mxu0
  %v1798 = vadd.f32 %v1721, %v1797
  %v1799 = vpop.f32.mrb[0].mxu0
  %v1800 = vadd.f32 %v1723, %v1799
  %1801 = vmatprep.mubr.f32.mxu0 %v1513
  %1802 = vmatmul.mubr.f32.gmra.mrb[0].mxu0 %v1512
  %v1803 = vpop.f32.mrb[0].mxu0
  %v1804 = vadd.f32 %v1727, %v1803
  %v1805 = vpop.f32.mrb[0].mxu0
  %v1806 = vadd.f32 %v1729, %v1805
  %1807 = vdwg.mxu0
  %v1808 = vmax.f32 %v1798, 0.0
  %v1809 = vmax.f32 %v1800, 0.0
  %v1810 = vmax.f32 %v1804, 0.0
  %v1811 = vmax.f32 %v1806, 0.0
  %v1812 = vld [vmem:[%s4] sm:$0xff]
  %v1813 = vld [vmem:[%s4 + $0x8] sm:$0xff]
  %v1814 = vld [vmem:[%s4 + $0x10] sm:$0xff]
  %v1815 = vld [vmem:[%s4 + $0x18] sm:$0xff]
  %v1816 = vld [vmem:[%s4 + $0x20] sm:$0xff]
  %v1817 = vld [vmem:[%s4 + $0x28] sm:$0xff]
  %v1818 = vld [vmem:[%s4 + $0x30] sm:$0xff]
  %v1819 = vld [vmem:[%s4 + $0x38] sm:$0xff]
  %v1820 = vld [vmem:[%s4 + $0x40] sm:$0xff]
  %v1821 = vld [vmem:[%s4 + $0x48] sm:$0xff]
  %v1822 = vld [vmem:[%s4 + $0x50] sm:$0xff]
  %v1823 = vld [vmem:[%s4 + $0x58] sm:$0xff]
  %v1824 = vld [vmem:[%s4 + $0x60] sm:$0xff]
  %v1825 = vld [vmem:[%s4 + $0x68] sm:$0xff]
  %v1826 = vld [vmem:[%s4 + $0x70] sm:$0xff]
  %v1827 = vld [vmem:[%s4 + $0x78] sm:$0xff]
  %v1828 = vld [vmem:[%s4 + $0x80] sm:$0xff]
  %v1829 = vld [vmem:[%s4 + $0x88] sm:$0xff]
  %v1830 = vld [vmem:[%s4 + $0x90] sm:$0xff]
  %v1831 = vld [vmem:[%s4 + $0x98] sm:$0xff]
  %v1832 = vld [vmem:[%s4 + $0xa0] sm:$0xff]
  %v1833 = vld [vmem:[%s4 + $0xa8] sm:$0xff]
  %v1834 = vld [vmem:[%s4 + $0xb0] sm:$0xff]
  %v1835 = vld [vmem:[%s4 + $0xb8] sm:$0xff]
  %v1836 = vld [vmem:[%s4 + $0xc0] sm:$0xff]
  %v1837 = vld [vmem:[%s4 + $0xc8] sm:$0xff]
  %v1838 = vld [vmem:[%s4 + $0xd0] sm:$0xff]
  %v1839 = vld [vmem:[%s4 + $0xd8] sm:$0xff]
  %v1840 = vld [vmem:[%s4 + $0xe0] sm:$0xff]
  %v1841 = vld [vmem:[%s4 + $0xe8] sm:$0xff]
  %v1842 = vld [vmem:[%s4 + $0xf0] sm:$0xff]
  %v1843 = vld [vmem:[%s4 + $0xf8] sm:$0xff]
  %v1844 = vld [vmem:[%s8] sm:$0x1]
  %v1846 = vlaneseq
  %v1847 = vshrl.u32 %v1846, 7
  %v1848 = vsub.s32 0, %v1847
  %v1849 = vrot.slane %v1844, %v1848
  %1851 = vmatprep.subr.mxu0 0.0
  %1852 = vmatpush1.msra.mxu0 %v1812
  %1853 = vmatprep.subr.mxu0 0.0
  %1854 = vmatpush1.msra.mxu0 %v1813
  %1855 = vmatprep.subr.mxu0 0.0
  %1856 = vmatpush1.msra.mxu0 %v1814
  %1857 = vmatprep.subr.mxu0 0.0
  %1858 = vmatpush1.msra.mxu0 %v1815
  %1859 = vmatprep.subr.mxu0 0.0
  %1860 = vmatpush1.msra.mxu0 %v1816
  %1861 = vmatprep.subr.mxu0 0.0
  %1862 = vmatpush1.msra.mxu0 %v1817
  %1863 = vmatprep.subr.mxu0 0.0
  %1864 = vmatpush1.msra.mxu0 %v1818
  %1865 = vmatprep.subr.mxu0 0.0
  %1866 = vmatpush1.msra.mxu0 %v1819
  %1867 = vmatprep.subr.mxu0 0.0
  %1868 = vmatpush1.msra.mxu0 %v1820
  %1869 = vmatprep.subr.mxu0 0.0
  %1870 = vmatpush1.msra.mxu0 %v1821
  %1871 = vmatprep.subr.mxu0 0.0
  %1872 = vmatpush1.msra.mxu0 %v1822
  %1873 = vmatprep.subr.mxu0 0.0
  %1874 = vmatpush1.msra.mxu0 %v1823
  %1875 = vmatprep.subr.mxu0 0.0
  %1876 = vmatpush1.msra.mxu0 %v1824
  %1877 = vmatprep.subr.mxu0 0.0
  %1878 = vmatpush1.msra.mxu0 %v1825
  %1879 = vmatprep.subr.mxu0 0.0
  %1880 = vmatpush1.msra.mxu0 %v1826
  %1881 = vmatprep.subr.mxu0 0.0
  %1882 = vmatpush1.msra.mxu0 %v1827
  %1883 = vmatprep.subr.mxu0 0.0
  %1884 = vmatpush1.msra.mxu0 %v1828
  %1885 = vmatprep.subr.mxu0 0.0
  %1886 = vmatpush1.msra.mxu0 %v1829
  %1887 = vmatprep.subr.mxu0 0.0
  %1888 = vmatpush1.msra.mxu0 %v1830
  %1889 = vmatprep.subr.mxu0 0.0
  %1890 = vmatpush1.msra.mxu0 %v1831
  %1891 = vmatprep.subr.mxu0 0.0
  %1892 = vmatpush1.msra.mxu0 %v1832
  %1893 = vmatprep.subr.mxu0 0.0
  %1894 = vmatpush1.msra.mxu0 %v1833
  %1895 = vmatprep.subr.mxu0 0.0
  %1896 = vmatpush1.msra.mxu0 %v1834
  %1897 = vmatprep.subr.mxu0 0.0
  %1898 = vmatpush1.msra.mxu0 %v1835
  %1899 = vmatprep.subr.mxu0 0.0
  %1900 = vmatpush1.msra.mxu0 %v1836
  %1901 = vmatprep.subr.mxu0 0.0
  %1902 = vmatpush1.msra.mxu0 %v1837
  %1903 = vmatprep.subr.mxu0 0.0
  %1904 = vmatpush1.msra.mxu0 %v1838
  %1905 = vmatprep.subr.mxu0 0.0
  %1906 = vmatpush1.msra.mxu0 %v1839
  %1907 = vmatprep.subr.mxu0 0.0
  %1908 = vmatpush1.msra.mxu0 %v1840
  %1909 = vmatprep.subr.mxu0 0.0
  %1910 = vmatpush1.msra.mxu0 %v1841
  %1911 = vmatprep.subr.mxu0 0.0
  %1912 = vmatpush1.msra.mxu0 %v1842
  %1913 = vmatprep.subr.mxu0 0.0
  %1914 = vmatpush1.msra.mxu0 %v1843
  %1915 = vmatprep.mubr.f32.mxu0 %v1809
  %1916 = vmatmul.mubr.f32.gmra.mrb[0].mxu0 %v1808
  %v1917 = vpop.f32.mrb[0].mxu0
  %v1918 = vadd.f32 %v1849, %v1917
  %v1919 = vpop.f32.mrb[0].mxu0
  %1920 = vmatprep.mubr.f32.mxu0 %v1811
  %1921 = vmatmul.mubr.f32.gmra.mrb[0].mxu0 %v1810
  %v1922 = vpop.f32.mrb[0].mxu0
  %v1923 = vadd.f32 %v1849, %v1922
  %v1924 = vpop.f32.mrb[0].mxu0
  %1925 = vdwg.mxu0
  %1926 = vst [vmem:[%s9] sm:$0xff] %v1918
  %1927 = vst [vmem:[%s9 + $0x8] sm:$0xff] %v1923
  // Predicated region
  $region38: #{encoder_forward.1} parent=0 // pred_check
    _
  $region39: #{encoder_forward.1} parent=0 // pred_check_branch
    %1929 = sbr.rel (0) target = $region41
  $region40: #{encoder_forward.1} parent=0 // pred_region
    _
  $region41: #{encoder_forward.1} parent=0 // pred_fallthru
    _
  // Predicated region
  $region42: #{encoder_forward.1} parent=0 // pred_check
    _
  $region43: #{encoder_forward.1} parent=0 // pred_check_branch
    %1931 = sbr.rel (0) target = $region45
  $region44: #{encoder_forward.1} parent=0 // pred_region
    _
  $region45: #{encoder_forward.1} parent=0 // pred_fallthru
    _

</llo_original>
